<compile_context>
chip_gen: v7x
topology: tpu7x:2x2x1
jax: 0.10.0
libtpu: 0.0.40
codegen_flags: <defaults>
</compile_context>

<pallas_src>
import jax
import jax.numpy as jnp
from jax.experimental import pallas as pl
from jax.experimental.pallas import tpu as pltpu


def _gcn_kernel(a_ref, x_ref,
                w1r_ref, w1s_ref, b1_ref,
                w2r_ref, w2s_ref, b2_ref,
                w3r_ref, w3s_ref, b3_ref,
                pa_ref, p_ref,
                o_ref):
    bf16 = jnp.bfloat16
    f32 = jnp.float32
    a = a_ref[...]                                     # bf16 [Np, Np]
    x = x_ref[...]                                     # bf16 [Np, Fp]

    # --- layer 1: GraphConv(F -> H) + ReLU (+ dropout: identity at eval) ---
    agg = jnp.dot(a, x, preferred_element_type=f32)                       # [Np, Fp]
    h = (jnp.dot(agg.astype(bf16), w1r_ref[...], preferred_element_type=f32)
         + jnp.dot(x, w1s_ref[...], preferred_element_type=f32)
         + b1_ref[...])                                                   # [Np, Hp]
    h = jnp.maximum(h, 0.0)

    # --- layer 2: GraphConv(H -> H) + ReLU (+ dropout: identity at eval) ---
    hb = h.astype(bf16)
    agg = jnp.dot(a, hb, preferred_element_type=f32)                      # [Np, Hp]
    h = (jnp.dot(agg.astype(bf16), w2r_ref[...], preferred_element_type=f32)
         + jnp.dot(hb, w2s_ref[...], preferred_element_type=f32)
         + b2_ref[...])
    h = jnp.maximum(h, 0.0)

    # --- layer 3: GraphConv(H -> O) fused with global_mean_pool ---
    #   out = (PA @ h) @ W3r + b3 + (P @ h) @ W3s   (PA = P @ A precomputed in wrapper)
    hb = h.astype(bf16)
    agg_p = jnp.dot(pa_ref[...], hb, preferred_element_type=f32)          # [G, Hp]
    pool = jnp.dot(p_ref[...], hb, preferred_element_type=f32)            # [G, Hp]
    o_ref[...] = (jnp.dot(agg_p.astype(bf16), w3r_ref[...], preferred_element_type=f32)
                  + jnp.dot(pool.astype(bf16), w3s_ref[...], preferred_element_type=f32)
                  + b3_ref[...])                                          # [G, O]


def _pad2(arr, rows, cols):
    return jnp.pad(arr, ((0, rows - arr.shape[0]), (0, cols - arr.shape[1])))


def graph_conv_net(a, x, params, p):
    """a: [N,N] dense adjacency (a[dst,src] = edge count), x: [N,F] node features,
    p: [G,N] mean-pool matrix (rows sum to 1). Returns pooled outputs [G,O] f32."""
    (w1r, w1s, b1, w2r, w2s, b2, w3r, w3s, b3) = params
    G, N = p.shape
    F = x.shape[1]
    H = w1r.shape[1]
    O = w3r.shape[1]
    bf16 = jnp.bfloat16

    # Pad N / F / H up to 128-lane multiples: all in-kernel loads/stores and MXU tiles
    # become fully aligned; padded rows/cols are zero so the math is unchanged.
    Np = N + ((-N) % 128)
    Fp = F + ((-F) % 128)
    Hp = H + ((-H) % 128)

    # --- one-time JAX-side prep (graph/weight glue) ---
    pa = p @ a                                  # [G,N]: folds global_mean_pool into layer 3
    a_bf = _pad2(a, Np, Np).astype(bf16)        # exact: small integer edge counts
    x_bf = _pad2(x, Np, Fp).astype(bf16)
    pa_bf = _pad2(pa, G, Np).astype(bf16)
    p_bf = _pad2(p, G, Np).astype(bf16)

    w1r_p = _pad2(w1r, Fp, Hp).astype(bf16)
    w1s_p = _pad2(w1s, Fp, Hp).astype(bf16)
    w2r_p = _pad2(w2r, Hp, Hp).astype(bf16)
    w2s_p = _pad2(w2s, Hp, Hp).astype(bf16)
    w3r_p = _pad2(w3r, Hp, O).astype(bf16)
    w3s_p = _pad2(w3s, Hp, O).astype(bf16)
    b1_p = _pad2(b1, 1, Hp).astype(jnp.float32)
    b2_p = _pad2(b2, 1, Hp).astype(jnp.float32)
    b3_f = b3.astype(jnp.float32)

    inputs = (a_bf, x_bf,
              w1r_p, w1s_p, b1_p,
              w2r_p, w2s_p, b2_p,
              w3r_p, w3s_p, b3_f,
              pa_bf, p_bf)

    def full_spec(arr):
        # Whole array as a single VMEM-resident block (shapes here are small).
        return pl.BlockSpec(arr.shape, lambda: tuple(0 for _ in arr.shape))

    return pl.pallas_call(
        _gcn_kernel,
        out_shape=jax.ShapeDtypeStruct((G, O), jnp.float32),
        grid_spec=pltpu.PrefetchScalarGridSpec(
            num_scalar_prefetch=0,
            grid=(),
            in_specs=[full_spec(arr) for arr in inputs],
            out_specs=pl.BlockSpec((G, O), lambda: (0, 0)),
        ),
        compiler_params=pltpu.CompilerParams(
            dimension_semantics=(),
            vmem_limit_bytes=32 * 1024 * 1024,  # explicit; raise / tile A as N grows
        ),
    )(*inputs)


def _reference_f32(a, x, params, p):
    """Original module semantics in f32 (unfused, pool after conv3)."""
    (w1r, w1s, b1, w2r, w2s, b2, w3r, w3s, b3) = params
    h = a @ x @ w1r + b1 + x @ w1s
    h = jnp.maximum(h, 0.0)
    h = a @ h @ w2r + b2 + h @ w2s
    h = jnp.maximum(h, 0.0)
    h = a @ h @ w3r + b3 + h @ w3s
    return p @ h


def _reference_kernel_math(a, x, params, p):
    """Plain-JAX mirror of the kernel arithmetic (bf16 MXU inputs, f32 accumulation,
    pool folded into layer 3) for a tight numeric check."""
    (w1r, w1s, b1, w2r, w2s, b2, w3r, w3s, b3) = params
    bf16, f32 = jnp.bfloat16, jnp.float32

    def dot(u, v):
        return jnp.dot(u.astype(bf16), v.astype(bf16), preferred_element_type=f32)

    a_bf = a.astype(bf16)
    x_bf = x.astype(bf16)
    pa = p @ a

    agg = dot(a_bf, x_bf)
    h = jnp.maximum(dot(agg, w1r) + dot(x_bf, w1s) + b1, 0.0)

    agg = dot(a_bf, h)
    h = jnp.maximum(dot(agg, w2r) + dot(h, w2s) + b2, 0.0)

    agg_p = dot(pa, h)
    pool = dot(p, h)
    return dot(agg_p, w3r) + dot(pool, w3s) + b3


if __name__ == "__main__":
    key = jax.random.PRNGKey(0)

    # Small synthetic graph batch: 2 graphs, 16 nodes total, 4 node features.
    N = 16          # total nodes
    F_IN = 4        # num_node_features
    H = 32          # hidden_dimension
    O = 8           # output_dimension
    G = 2           # number of graphs in the batch
    E = 48          # number of directed edges

    keys = jax.random.split(key, 12)
    x = jax.random.normal(keys[0], (N, F_IN), dtype=jnp.float32)
    src = jax.random.randint(keys[1], (E,), 0, N)
    dst = jax.random.randint(keys[2], (E,), 0, N)
    batch = jnp.concatenate([jnp.zeros(N // 2, jnp.int32),
                             jnp.ones(N - N // 2, jnp.int32)])

    # Densify graph structure (glue, plain JAX).
    a = jnp.zeros((N, N), jnp.float32).at[dst, src].add(1.0)
    onehot = (batch[None, :] == jnp.arange(G)[:, None]).astype(jnp.float32)
    counts = jnp.maximum(onehot.sum(axis=1, keepdims=True), 1.0)
    p = onehot / counts                                  # [G, N] mean-pool matrix

    # Deterministic parameter init (GraphConv: lin_rel has bias, lin_root no bias).
    def lin(k, fan_in, fan_out):
        bound = 1.0 / jnp.sqrt(jnp.float32(fan_in))
        return jax.random.uniform(k, (fan_in, fan_out), jnp.float32, -bound, bound)

    w1r = lin(keys[3], F_IN, H); w1s = lin(keys[4], F_IN, H)
    b1 = jax.random.uniform(keys[5], (1, H), jnp.float32, -1.0, 1.0) / jnp.sqrt(F_IN)
    w2r = lin(keys[6], H, H); w2s = lin(keys[7], H, H)
    b2 = jax.random.uniform(keys[8], (1, H), jnp.float32, -1.0, 1.0) / jnp.sqrt(H)
    w3r = lin(keys[9], H, O); w3s = lin(keys[10], H, O)
    b3 = jax.random.uniform(keys[11], (1, O), jnp.float32, -1.0, 1.0) / jnp.sqrt(H)

    params = (w1r, w1s, b1, w2r, w2s, b2, w3r, w3s, b3)

    out = jax.block_until_ready(graph_conv_net(a, x, params, p))
    assert out.shape == (G, O)

    # Tight check: Pallas kernel vs identical bf16/fused math in plain JAX.
    ref_bf = _reference_kernel_math(a, x, params, p)
    assert jnp.allclose(out, ref_bf, atol=2e-3, rtol=2e-3), "mismatch vs kernel-math reference"

    # Semantics check vs the original f32 module math (loose: bf16 MXU inputs, ~1% typical).
    ref32 = _reference_f32(a, x, params, p)
    rel_l2 = float(jnp.linalg.norm(out - ref32) / jnp.linalg.norm(ref32))
    assert rel_l2 < 5e-2, f"relative error vs f32 reference too large: {rel_l2}"

    print("KERNEL_OK")
</pallas_src>

<mosaic_0001>
module attributes {stable_mosaic.version = 11 : i64} {
  func.func @_gcn_kernel(%arg0: memref<128x128xbf16, #tpu.memory_space<vmem>>, %arg1: memref<128x128xbf16, #tpu.memory_space<vmem>>, %arg2: memref<128x128xbf16, #tpu.memory_space<vmem>>, %arg3: memref<128x128xbf16, #tpu.memory_space<vmem>>, %arg4: memref<1x128xf32, #tpu.memory_space<vmem>>, %arg5: memref<128x128xbf16, #tpu.memory_space<vmem>>, %arg6: memref<128x128xbf16, #tpu.memory_space<vmem>>, %arg7: memref<1x128xf32, #tpu.memory_space<vmem>>, %arg8: memref<128x8xbf16, #tpu.memory_space<vmem>>, %arg9: memref<128x8xbf16, #tpu.memory_space<vmem>>, %arg10: memref<1x8xf32, #tpu.memory_space<vmem>>, %arg11: memref<2x128xbf16, #tpu.memory_space<vmem>>, %arg12: memref<2x128xbf16, #tpu.memory_space<vmem>>, %arg13: memref<2x8xf32, #tpu.memory_space<vmem>>) attributes {dimension_semantics = [], scalar_prefetch = 0 : i64, scratch_operands = 0 : i64, tpu.core_type = #tpu.core_type<tc>} {
    %c0 = arith.constant 0 : index
    %c0_0 = arith.constant 0 : index
    %0 = vector.load %arg0[%c0, %c0_0] : memref<128x128xbf16, #tpu.memory_space<vmem>>, vector<128x128xbf16>
    %c0_1 = arith.constant 0 : index
    %c0_2 = arith.constant 0 : index
    %1 = vector.load %arg1[%c0_1, %c0_2] : memref<128x128xbf16, #tpu.memory_space<vmem>>, vector<128x128xbf16>
    %cst = arith.constant dense<0.000000e+00> : vector<128x128xf32>
    %2 = tpu.matmul %0, %1, %cst {dimension_numbers = #tpu.dot_dimension_numbers<[1], [0], [0], [1], [0, 0, 1, 1], [], []>} : vector<128x128xbf16>, vector<128x128xbf16>, vector<128x128xf32> -> vector<128x128xf32>
    %3 = arith.truncf %2 : vector<128x128xf32> to vector<128x128xbf16>
    %c0_3 = arith.constant 0 : index
    %c0_4 = arith.constant 0 : index
    %4 = vector.load %arg2[%c0_3, %c0_4] : memref<128x128xbf16, #tpu.memory_space<vmem>>, vector<128x128xbf16>
    %cst_5 = arith.constant dense<0.000000e+00> : vector<128x128xf32>
    %5 = tpu.matmul %3, %4, %cst_5 {dimension_numbers = #tpu.dot_dimension_numbers<[1], [0], [0], [1], [0, 0, 1, 1], [], []>} : vector<128x128xbf16>, vector<128x128xbf16>, vector<128x128xf32> -> vector<128x128xf32>
    %c0_6 = arith.constant 0 : index
    %c0_7 = arith.constant 0 : index
    %6 = vector.load %arg3[%c0_6, %c0_7] : memref<128x128xbf16, #tpu.memory_space<vmem>>, vector<128x128xbf16>
    %cst_8 = arith.constant dense<0.000000e+00> : vector<128x128xf32>
    %7 = tpu.matmul %1, %6, %cst_8 {dimension_numbers = #tpu.dot_dimension_numbers<[1], [0], [0], [1], [0, 0, 1, 1], [], []>} : vector<128x128xbf16>, vector<128x128xbf16>, vector<128x128xf32> -> vector<128x128xf32>
    %8 = arith.addf %5, %7 : vector<128x128xf32>
    %c0_9 = arith.constant 0 : index
    %c0_10 = arith.constant 0 : index
    %9 = vector.load %arg4[%c0_9, %c0_10] : memref<1x128xf32, #tpu.memory_space<vmem>>, vector<1x128xf32>
    %10 = vector.broadcast %9 : vector<1x128xf32> to vector<128x128xf32>
    %11 = arith.addf %8, %10 : vector<128x128xf32>
    %cst_11 = arith.constant 0.000000e+00 : f32
    %12 = vector.broadcast %cst_11 : f32 to vector<128x128xf32>
    %13 = arith.maximumf %11, %12 : vector<128x128xf32>
    %14 = arith.truncf %13 : vector<128x128xf32> to vector<128x128xbf16>
    %cst_12 = arith.constant dense<0.000000e+00> : vector<128x128xf32>
    %15 = tpu.matmul %0, %14, %cst_12 {dimension_numbers = #tpu.dot_dimension_numbers<[1], [0], [0], [1], [0, 0, 1, 1], [], []>} : vector<128x128xbf16>, vector<128x128xbf16>, vector<128x128xf32> -> vector<128x128xf32>
    %16 = arith.truncf %15 : vector<128x128xf32> to vector<128x128xbf16>
    %c0_13 = arith.constant 0 : index
    %c0_14 = arith.constant 0 : index
    %17 = vector.load %arg5[%c0_13, %c0_14] : memref<128x128xbf16, #tpu.memory_space<vmem>>, vector<128x128xbf16>
    %cst_15 = arith.constant dense<0.000000e+00> : vector<128x128xf32>
    %18 = tpu.matmul %16, %17, %cst_15 {dimension_numbers = #tpu.dot_dimension_numbers<[1], [0], [0], [1], [0, 0, 1, 1], [], []>} : vector<128x128xbf16>, vector<128x128xbf16>, vector<128x128xf32> -> vector<128x128xf32>
    %c0_16 = arith.constant 0 : index
    %c0_17 = arith.constant 0 : index
    %19 = vector.load %arg6[%c0_16, %c0_17] : memref<128x128xbf16, #tpu.memory_space<vmem>>, vector<128x128xbf16>
    %cst_18 = arith.constant dense<0.000000e+00> : vector<128x128xf32>
    %20 = tpu.matmul %14, %19, %cst_18 {dimension_numbers = #tpu.dot_dimension_numbers<[1], [0], [0], [1], [0, 0, 1, 1], [], []>} : vector<128x128xbf16>, vector<128x128xbf16>, vector<128x128xf32> -> vector<128x128xf32>
    %21 = arith.addf %18, %20 : vector<128x128xf32>
    %c0_19 = arith.constant 0 : index
    %c0_20 = arith.constant 0 : index
    %22 = vector.load %arg7[%c0_19, %c0_20] : memref<1x128xf32, #tpu.memory_space<vmem>>, vector<1x128xf32>
    %23 = vector.broadcast %22 : vector<1x128xf32> to vector<128x128xf32>
    %24 = arith.addf %21, %23 : vector<128x128xf32>
    %cst_21 = arith.constant 0.000000e+00 : f32
    %25 = vector.broadcast %cst_21 : f32 to vector<128x128xf32>
    %26 = arith.maximumf %24, %25 : vector<128x128xf32>
    %27 = arith.truncf %26 : vector<128x128xf32> to vector<128x128xbf16>
    %c0_22 = arith.constant 0 : index
    %c0_23 = arith.constant 0 : index
    %28 = vector.load %arg11[%c0_22, %c0_23] : memref<2x128xbf16, #tpu.memory_space<vmem>>, vector<2x128xbf16>
    %cst_24 = arith.constant dense<0.000000e+00> : vector<2x128xf32>
    %29 = tpu.matmul %28, %27, %cst_24 {dimension_numbers = #tpu.dot_dimension_numbers<[1], [0], [0], [1], [0, 0, 1, 1], [], []>} : vector<2x128xbf16>, vector<128x128xbf16>, vector<2x128xf32> -> vector<2x128xf32>
    %c0_25 = arith.constant 0 : index
    %c0_26 = arith.constant 0 : index
    %30 = vector.load %arg12[%c0_25, %c0_26] : memref<2x128xbf16, #tpu.memory_space<vmem>>, vector<2x128xbf16>
    %cst_27 = arith.constant dense<0.000000e+00> : vector<2x128xf32>
    %31 = tpu.matmul %30, %27, %cst_27 {dimension_numbers = #tpu.dot_dimension_numbers<[1], [0], [0], [1], [0, 0, 1, 1], [], []>} : vector<2x128xbf16>, vector<128x128xbf16>, vector<2x128xf32> -> vector<2x128xf32>
    %32 = arith.truncf %29 : vector<2x128xf32> to vector<2x128xbf16>
    %c0_28 = arith.constant 0 : index
    %c0_29 = arith.constant 0 : index
    %33 = vector.load %arg8[%c0_28, %c0_29] : memref<128x8xbf16, #tpu.memory_space<vmem>>, vector<128x8xbf16>
    %cst_30 = arith.constant dense<0.000000e+00> : vector<2x8xf32>
    %34 = tpu.matmul %32, %33, %cst_30 {dimension_numbers = #tpu.dot_dimension_numbers<[1], [0], [0], [1], [0, 0, 1, 1], [], []>} : vector<2x128xbf16>, vector<128x8xbf16>, vector<2x8xf32> -> vector<2x8xf32>
    %35 = arith.truncf %31 : vector<2x128xf32> to vector<2x128xbf16>
    %c0_31 = arith.constant 0 : index
    %c0_32 = arith.constant 0 : index
    %36 = vector.load %arg9[%c0_31, %c0_32] : memref<128x8xbf16, #tpu.memory_space<vmem>>, vector<128x8xbf16>
    %cst_33 = arith.constant dense<0.000000e+00> : vector<2x8xf32>
    %37 = tpu.matmul %35, %36, %cst_33 {dimension_numbers = #tpu.dot_dimension_numbers<[1], [0], [0], [1], [0, 0, 1, 1], [], []>} : vector<2x128xbf16>, vector<128x8xbf16>, vector<2x8xf32> -> vector<2x8xf32>
    %38 = arith.addf %34, %37 : vector<2x8xf32>
    %c0_34 = arith.constant 0 : index
    %c0_35 = arith.constant 0 : index
    %39 = vector.load %arg10[%c0_34, %c0_35] : memref<1x8xf32, #tpu.memory_space<vmem>>, vector<1x8xf32>
    %40 = vector.broadcast %39 : vector<1x8xf32> to vector<2x8xf32>
    %41 = arith.addf %38, %40 : vector<2x8xf32>
    %c0_36 = arith.constant 0 : index
    %c0_37 = arith.constant 0 : index
    %42 = vector.load %arg13[%c0_36, %c0_37] : memref<2x8xf32, #tpu.memory_space<vmem>>, vector<2x8xf32>
    tpu.vector_store %arg13[%c0_36, %c0_37], %41 {strides = array<i32>} : memref<2x8xf32, #tpu.memory_space<vmem>>, vector<2x8xf32>,
    return
  }
}

</mosaic_0001>

<llo_original>
// kernel: tpu_custom_call.1
$region0: #{tpu_custom_call.1}
  #allocation0 [shape = 'u32[]', space=smem, size = 0x4, offset = 0x4, fixed_abs, tag = 'smem constant byte address 0x4 - core index']
  #allocation1 [shape = 'u32[144,128]{1,0:T(1,128)}', space=vmem, size = 0x12000, scoped, tag = 'internal scratch']
  %s0 = inlined_call_operand.vmem [shape: bf16[128,128], index: 0, kind: input, shape index: {}]
  %s1 = inlined_call_operand.vmem [shape: bf16[128,128], index: 1, kind: input, shape index: {}]
  %s2 = inlined_call_operand.hbm [shape: bf16[128,128], index: 2, kind: input, shape index: {}]
  %s3 = inlined_call_operand.hbm [shape: bf16[128,128], index: 3, kind: input, shape index: {}]
  %s4 = inlined_call_operand.vmem [shape: f32[1,128], index: 4, kind: input, shape index: {}]
  %s5 = inlined_call_operand.hbm [shape: bf16[128,128], index: 5, kind: input, shape index: {}]
  %s6 = inlined_call_operand.hbm [shape: bf16[128,128], index: 6, kind: input, shape index: {}]
  %s7 = inlined_call_operand.vmem [shape: f32[1,128], index: 7, kind: input, shape index: {}]
  %s8 = inlined_call_operand.vmem [shape: bf16[128,8], index: 8, kind: input, shape index: {}]
  %s9 = inlined_call_operand.vmem [shape: bf16[128,8], index: 9, kind: input, shape index: {}]
  %s10 = inlined_call_operand.vmem [shape: f32[1,8], index: 10, kind: input, shape index: {}]
  %s11 = inlined_call_operand.vmem [shape: bf16[2,128], index: 11, kind: input, shape index: {}]
  %s12 = inlined_call_operand.vmem [shape: bf16[2,128], index: 12, kind: input, shape index: {}]
  %s13 = inlined_call_operand.hbm [shape: f32[2,8], index: 13, kind: output, shape index: {}]
  %s14 = sld [smem:[#allocation0]]
  $region78: #{tpu_custom_call.1} parent=0
    _
  %s16 = ssub.s32 1, %s14
  %s17 = scalar_select 0, %s16, %s14
  $region1: #{tpu_custom_call.1} parent=0
    #allocation2 [shape = 'u8[32768]{0}', space=vmem, size = 0x8000, scoped, tag = 'input window, operand 2, single buffered']
    #allocation3 [shape = 's32[1]{0}', space=sflag, size = 0x4, scoped, tag = 'scoped memory for tpu_custom_call.1']
    #allocation4 [shape = 's32[1]{0}', space=sflag, size = 0x4, scoped, tag = 'scoped memory for tpu_custom_call.1']
    #allocation5 [shape = 'u8[32768]{0}', space=vmem, size = 0x8000, scoped, tag = 'input window, operand 3, single buffered']
    #allocation6 [shape = 's32[1]{0}', space=sflag, size = 0x4, scoped, tag = 'scoped memory for tpu_custom_call.1']
    #allocation7 [shape = 'u8[32768]{0}', space=vmem, size = 0x8000, scoped, tag = 'input window, operand 5, single buffered']
    #allocation8 [shape = 'u8[32768]{0}', space=vmem, size = 0x8000, scoped, tag = 'input window, operand 6, single buffered']
    #allocation9 [shape = 's32[1]{0}', space=sflag, size = 0x4, scoped, tag = 'scoped memory for tpu_custom_call.1']
    #allocation10 [shape = 'u8[1024]{0}', space=vmem, size = 0x400, scoped, tag = 'output window, operand 0, single buffered']
    %18 = vsyncpa [#allocation3], 0
    %19 = vsyncpa [#allocation6], 0
    %20 = vsyncpa [#allocation9], 0
    %21 = vsyncpa [#allocation4], 0
    // Predicated region
    $region2: #{tpu_custom_call.1} parent=1 // pred_check
      _
    $region3: #{tpu_custom_call.1} parent=1 // pred_check_branch
      %23 = sbr.rel (0) target = $region5
    $region4: #{tpu_custom_call.1} parent=1 // pred_region
      _
    $region5: #{tpu_custom_call.1} parent=1 // pred_fallthru
      _
    // Predicated region
    $region6: #{tpu_custom_call.1} parent=1 // pred_check
      _
    $region7: #{tpu_custom_call.1} parent=1 // pred_check_branch
      %25 = sbr.rel (0) target = $region9
    $region8: #{tpu_custom_call.1} parent=1 // pred_region
      _
    $region9: #{tpu_custom_call.1} parent=1 // pred_fallthru
      _
    // Predicated region
    $region10: #{tpu_custom_call.1} parent=1 // pred_check
      _
    $region11: #{tpu_custom_call.1} parent=1 // pred_check_branch
      %27 = sbr.rel (0) target = $region13
    $region12: #{tpu_custom_call.1} parent=1 // pred_region
      %s29 = ssub.s32 1024, 1024
      %30 = vsyncadd [#allocation3], %s29
      %s31 = sshll.u32 [#allocation2], 4
      %s32 = int_to_ptr.vmem [resolvable:$true] %s31
      %37 = dma.hbm_to_vmem [thread:$0]  %s2, 1024, %s32, [#allocation3], 64, 64, 4
    $region13: #{tpu_custom_call.1} parent=1 // pred_fallthru
      _
    // Predicated region
    $region14: #{tpu_custom_call.1} parent=1 // pred_check
      _
    $region15: #{tpu_custom_call.1} parent=1 // pred_check_branch
      %39 = sbr.rel (0) target = $region17
    $region16: #{tpu_custom_call.1} parent=1 // pred_region
      %s41 = ssub.s32 1024, 1024
      %42 = vsyncadd [#allocation6], %s41
      %s43 = sshll.u32 [#allocation5], 4
      %s44 = int_to_ptr.vmem [resolvable:$true] %s43
      %49 = dma.hbm_to_vmem [thread:$0]  %s3, 1024, %s44, [#allocation6], 64, 64, 4
    $region17: #{tpu_custom_call.1} parent=1 // pred_fallthru
      _
    // Predicated region
    $region18: #{tpu_custom_call.1} parent=1 // pred_check
      _
    $region19: #{tpu_custom_call.1} parent=1 // pred_check_branch
      %51 = sbr.rel (0) target = $region21
    $region20: #{tpu_custom_call.1} parent=1 // pred_region
      _
    $region21: #{tpu_custom_call.1} parent=1 // pred_fallthru
      _
    // Predicated region
    $region22: #{tpu_custom_call.1} parent=1 // pred_check
      _
    $region23: #{tpu_custom_call.1} parent=1 // pred_check_branch
      %53 = sbr.rel (0) target = $region25
    $region24: #{tpu_custom_call.1} parent=1 // pred_region
      %s55 = ssub.s32 1024, 1024
      %56 = vsyncadd [#allocation6], %s55
      %s57 = sshll.u32 [#allocation7], 4
      %s58 = int_to_ptr.vmem [resolvable:$true] %s57
      %63 = dma.hbm_to_vmem [thread:$0]  %s5, 1024, %s58, [#allocation6], 64, 64, 4
    $region25: #{tpu_custom_call.1} parent=1 // pred_fallthru
      _
    // Predicated region
    $region26: #{tpu_custom_call.1} parent=1 // pred_check
      _
    $region27: #{tpu_custom_call.1} parent=1 // pred_check_branch
      %65 = sbr.rel (0) target = $region29
    $region28: #{tpu_custom_call.1} parent=1 // pred_region
      %s67 = ssub.s32 1024, 1024
      %68 = vsyncadd [#allocation9], %s67
      %s69 = sshll.u32 [#allocation8], 4
      %s70 = int_to_ptr.vmem [resolvable:$true] %s69
      %75 = dma.hbm_to_vmem [thread:$0]  %s6, 1024, %s70, [#allocation9], 64, 64, 4
    $region29: #{tpu_custom_call.1} parent=1 // pred_fallthru
      _
    // Predicated region
    $region30: #{tpu_custom_call.1} parent=1 // pred_check
      _
    $region31: #{tpu_custom_call.1} parent=1 // pred_check_branch
      %77 = sbr.rel (0) target = $region33
    $region32: #{tpu_custom_call.1} parent=1 // pred_region
      _
    $region33: #{tpu_custom_call.1} parent=1 // pred_fallthru
      _
    // Predicated region
    $region34: #{tpu_custom_call.1} parent=1 // pred_check
      _
    $region35: #{tpu_custom_call.1} parent=1 // pred_check_branch
      %79 = sbr.rel (0) target = $region37
    $region36: #{tpu_custom_call.1} parent=1 // pred_region
      _
    $region37: #{tpu_custom_call.1} parent=1 // pred_fallthru
      _
    // Predicated region
    $region38: #{tpu_custom_call.1} parent=1 // pred_check
      _
    $region39: #{tpu_custom_call.1} parent=1 // pred_check_branch
      %81 = sbr.rel (0) target = $region41
    $region40: #{tpu_custom_call.1} parent=1 // pred_region
      _
    $region41: #{tpu_custom_call.1} parent=1 // pred_fallthru
      _
    // Predicated region
    $region42: #{tpu_custom_call.1} parent=1 // pred_check
      _
    $region43: #{tpu_custom_call.1} parent=1 // pred_check_branch
      %83 = sbr.rel (0) target = $region45
    $region44: #{tpu_custom_call.1} parent=1 // pred_region
      _
    $region45: #{tpu_custom_call.1} parent=1 // pred_fallthru
      _
    // Predicated region
    $region46: #{tpu_custom_call.1} parent=1 // pred_check
      _
    $region47: #{tpu_custom_call.1} parent=1 // pred_check_branch
      %85 = sbr.rel (0) target = $region49
    $region48: #{tpu_custom_call.1} parent=1 // pred_region
      _
    $region49: #{tpu_custom_call.1} parent=1 // pred_fallthru
      _
    // Predicated region
    $region50: #{tpu_custom_call.1} parent=1 // pred_check
      _
    $region51: #{tpu_custom_call.1} parent=1 // pred_check_branch
      %87 = sbr.rel (0) target = $region53
    $region52: #{tpu_custom_call.1} parent=1 // pred_region
      _
    $region53: #{tpu_custom_call.1} parent=1 // pred_fallthru
      _
    // Predicated region
    $region54: #{tpu_custom_call.1} parent=1 // pred_check
      _
    $region55: #{tpu_custom_call.1} parent=1 // pred_check_branch
      %89 = sbr.rel (0) target = $region57
    $region56: #{tpu_custom_call.1} parent=1 // pred_region
      %90 = dma.done [#allocation3], 1024
    $region57: #{tpu_custom_call.1} parent=1 // pred_fallthru
      _
    // Predicated region
    $region58: #{tpu_custom_call.1} parent=1 // pred_check
      _
    $region59: #{tpu_custom_call.1} parent=1 // pred_check_branch
      %92 = sbr.rel (0) target = $region61
    $region60: #{tpu_custom_call.1} parent=1 // pred_region
      %93 = dma.done [#allocation6], 1024
    $region61: #{tpu_custom_call.1} parent=1 // pred_fallthru
      _
    // Predicated region
    $region62: #{tpu_custom_call.1} parent=1 // pred_check
      _
    $region63: #{tpu_custom_call.1} parent=1 // pred_check_branch
      %95 = sbr.rel (0) target = $region65
    $region64: #{tpu_custom_call.1} parent=1 // pred_region
      %96 = dma.done [#allocation6], 1024
    $region65: #{tpu_custom_call.1} parent=1 // pred_fallthru
      _
    // Predicated region
    $region66: #{tpu_custom_call.1} parent=1 // pred_check
      _
    $region67: #{tpu_custom_call.1} parent=1 // pred_check_branch
      %98 = sbr.rel (0) target = $region69
    $region68: #{tpu_custom_call.1} parent=1 // pred_region
      %99 = dma.done [#allocation9], 1024
    $region69: #{tpu_custom_call.1} parent=1 // pred_fallthru
      _
    %v101 = vld [vmem:[%s0] sm:$0xf]
    %v102 = vld [vmem:[%s0 + $0x4] sm:$0xf]
    %v103 = vld [vmem:[%s0 + $0x8] sm:$0xf]
    %v104 = vld [vmem:[%s0 + $0xc] sm:$0xf]
    %v105 = vld [vmem:[%s0 + $0x10] sm:$0xf]
    %v106 = vld [vmem:[%s0 + $0x14] sm:$0xf]
    %v107 = vld [vmem:[%s0 + $0x18] sm:$0xf]
    %v108 = vld [vmem:[%s0 + $0x1c] sm:$0xf]
    %v109 = vld [vmem:[%s0 + $0x20] sm:$0xf]
    %v110 = vld [vmem:[%s0 + $0x24] sm:$0xf]
    %v111 = vld [vmem:[%s0 + $0x28] sm:$0xf]
    %v112 = vld [vmem:[%s0 + $0x2c] sm:$0xf]
    %v113 = vld [vmem:[%s0 + $0x30] sm:$0xf]
    %v114 = vld [vmem:[%s0 + $0x34] sm:$0xf]
    %v115 = vld [vmem:[%s0 + $0x38] sm:$0xf]
    %v116 = vld [vmem:[%s0 + $0x3c] sm:$0xf]
    %v117 = vld [vmem:[%s1] sm:$0xf]
    %v118 = vld [vmem:[%s1 + $0x4] sm:$0xf]
    %v119 = vld [vmem:[%s1 + $0x8] sm:$0xf]
    %v120 = vld [vmem:[%s1 + $0xc] sm:$0xf]
    %v121 = vld [vmem:[%s1 + $0x10] sm:$0xf]
    %v122 = vld [vmem:[%s1 + $0x14] sm:$0xf]
    %v123 = vld [vmem:[%s1 + $0x18] sm:$0xf]
    %v124 = vld [vmem:[%s1 + $0x1c] sm:$0xf]
    %v125 = vld [vmem:[%s1 + $0x20] sm:$0xf]
    %v126 = vld [vmem:[%s1 + $0x24] sm:$0xf]
    %v127 = vld [vmem:[%s1 + $0x28] sm:$0xf]
    %v128 = vld [vmem:[%s1 + $0x2c] sm:$0xf]
    %v129 = vld [vmem:[%s1 + $0x30] sm:$0xf]
    %v130 = vld [vmem:[%s1 + $0x34] sm:$0xf]
    %v131 = vld [vmem:[%s1 + $0x38] sm:$0xf]
    %v132 = vld [vmem:[%s1 + $0x3c] sm:$0xf]
    %v149 = vunpack.c.l.b16 %v101
    %v150 = vunpack.c.l.b16 %v102
    %v151 = vunpack.c.l.b16 %v103
    %v152 = vunpack.c.l.b16 %v104
    %v153 = vunpack.c.l.b16 %v105
    %v154 = vunpack.c.l.b16 %v106
    %v155 = vunpack.c.l.b16 %v107
    %v156 = vunpack.c.l.b16 %v108
    %v157 = vunpack.c.l.b16 %v109
    %v158 = vunpack.c.l.b16 %v110
    %v159 = vunpack.c.l.b16 %v111
    %v160 = vunpack.c.l.b16 %v112
    %v161 = vunpack.c.l.b16 %v113
    %v162 = vunpack.c.l.b16 %v114
    %v163 = vunpack.c.l.b16 %v115
    %v164 = vunpack.c.l.b16 %v116
    %v165 = vpack.c.b16 %v150, %v149
    %v166 = vpack.c.b16 %v152, %v151
    %v167 = vpack.c.b16 %v154, %v153
    %v168 = vpack.c.b16 %v156, %v155
    %v169 = vpack.c.b16 %v158, %v157
    %v170 = vpack.c.b16 %v160, %v159
    %v171 = vpack.c.b16 %v162, %v161
    %v172 = vpack.c.b16 %v164, %v163
    %v197 = vunpack.c.l.b16 %v117
    %v198 = vunpack.c.l.b16 %v118
    %v199 = vunpack.c.l.b16 %v119
    %v200 = vunpack.c.l.b16 %v120
    %v201 = vunpack.c.l.b16 %v121
    %v202 = vunpack.c.l.b16 %v122
    %v203 = vunpack.c.l.b16 %v123
    %v204 = vunpack.c.l.b16 %v124
    %v205 = vunpack.c.l.b16 %v125
    %v206 = vunpack.c.l.b16 %v126
    %v207 = vunpack.c.l.b16 %v127
    %v208 = vunpack.c.l.b16 %v128
    %v209 = vunpack.c.l.b16 %v129
    %v210 = vunpack.c.l.b16 %v130
    %v211 = vunpack.c.l.b16 %v131
    %v212 = vunpack.c.l.b16 %v132
    %v213 = vpack.c.b16 %v198, %v197
    %v214 = vpack.c.b16 %v200, %v199
    %v215 = vpack.c.b16 %v202, %v201
    %v216 = vpack.c.b16 %v204, %v203
    %v217 = vpack.c.b16 %v206, %v205
    %v218 = vpack.c.b16 %v208, %v207
    %v219 = vpack.c.b16 %v210, %v209
    %v220 = vpack.c.b16 %v212, %v211
    %229 = vmatprep.subr.bf16.mxu0 0
    %230 = vmatpush1.bf16.msra.mxu0 %v213
    %231 = vmatprep.subr.bf16.mxu0 0
    %232 = vmatpush1.bf16.msra.mxu0 %v214
    %233 = vmatprep.subr.bf16.mxu0 0
    %234 = vmatpush1.bf16.msra.mxu0 %v215
    %235 = vmatprep.subr.bf16.mxu0 0
    %236 = vmatpush1.bf16.msra.mxu0 %v216
    %237 = vmatprep.subr.bf16.mxu0 0
    %238 = vmatpush1.bf16.msra.mxu0 %v217
    %239 = vmatprep.subr.bf16.mxu0 0
    %240 = vmatpush1.bf16.msra.mxu0 %v218
    %241 = vmatprep.subr.bf16.mxu0 0
    %242 = vmatpush1.bf16.msra.mxu0 %v219
    %243 = vmatprep.subr.bf16.mxu0 0
    %244 = vmatpush1.bf16.msra.mxu0 %v220
    %245 = vmatprep.subr.bf16.mxu0 0
    %246 = vmatpush1.bf16.msra.mxu0 0
    %247 = vmatprep.subr.bf16.mxu0 0
    %248 = vmatpush1.bf16.msra.mxu0 0
    %249 = vmatprep.subr.bf16.mxu0 0
    %250 = vmatpush1.bf16.msra.mxu0 0
    %251 = vmatprep.subr.bf16.mxu0 0
    %252 = vmatpush1.bf16.msra.mxu0 0
    %253 = vmatprep.subr.bf16.mxu0 0
    %254 = vmatpush1.bf16.msra.mxu0 0
    %255 = vmatprep.subr.bf16.mxu0 0
    %256 = vmatpush1.bf16.msra.mxu0 0
    %257 = vmatprep.subr.bf16.mxu0 0
    %258 = vmatpush1.bf16.msra.mxu0 0
    %259 = vmatprep.subr.bf16.mxu0 0
    %260 = vmatpush1.bf16.msra.mxu0 0
    %261 = vmatprep.mubr.bf16.mxu0 0
    %262 = vmatmul.mubr.bf16.gmra.mrb[0].mxu0 %v165
    %v263 = vpop.f32.mrb[0].mxu0
    %v264 = vadd.f32 0.0, %v263
    %v265 = vpop.f32.mrb[0].mxu0
    %v266 = vpop.f32.mrb[0].mxu0
    %v267 = vadd.f32 0.0, %v266
    %v268 = vpop.f32.mrb[0].mxu0
    %269 = vmatprep.mubr.bf16.mxu0 0
    %270 = vmatmul.mubr.bf16.gmra.mrb[0].mxu0 %v166
    %v271 = vpop.f32.mrb[0].mxu0
    %v272 = vadd.f32 0.0, %v271
    %v273 = vpop.f32.mrb[0].mxu0
    %v274 = vpop.f32.mrb[0].mxu0
    %v275 = vadd.f32 0.0, %v274
    %v276 = vpop.f32.mrb[0].mxu0
    %277 = vmatprep.mubr.bf16.mxu0 0
    %278 = vmatmul.mubr.bf16.gmra.mrb[0].mxu0 %v167
    %v279 = vpop.f32.mrb[0].mxu0
    %v280 = vadd.f32 0.0, %v279
    %v281 = vpop.f32.mrb[0].mxu0
    %v282 = vpop.f32.mrb[0].mxu0
    %v283 = vadd.f32 0.0, %v282
    %v284 = vpop.f32.mrb[0].mxu0
    %285 = vmatprep.mubr.bf16.mxu0 0
    %286 = vmatmul.mubr.bf16.gmra.mrb[0].mxu0 %v168
    %v287 = vpop.f32.mrb[0].mxu0
    %v288 = vadd.f32 0.0, %v287
    %v289 = vpop.f32.mrb[0].mxu0
    %v290 = vpop.f32.mrb[0].mxu0
    %v291 = vadd.f32 0.0, %v290
    %v292 = vpop.f32.mrb[0].mxu0
    %293 = vmatprep.mubr.bf16.mxu0 0
    %294 = vmatmul.mubr.bf16.gmra.mrb[0].mxu0 %v169
    %v295 = vpop.f32.mrb[0].mxu0
    %v296 = vadd.f32 0.0, %v295
    %v297 = vpop.f32.mrb[0].mxu0
    %v298 = vpop.f32.mrb[0].mxu0
    %v299 = vadd.f32 0.0, %v298
    %v300 = vpop.f32.mrb[0].mxu0
    %301 = vmatprep.mubr.bf16.mxu0 0
    %302 = vmatmul.mubr.bf16.gmra.mrb[0].mxu0 %v170
    %v303 = vpop.f32.mrb[0].mxu0
    %v304 = vadd.f32 0.0, %v303
    %v305 = vpop.f32.mrb[0].mxu0
    %v306 = vpop.f32.mrb[0].mxu0
    %v307 = vadd.f32 0.0, %v306
    %v308 = vpop.f32.mrb[0].mxu0
    %309 = vmatprep.mubr.bf16.mxu0 0
    %310 = vmatmul.mubr.bf16.gmra.mrb[0].mxu0 %v171
    %v311 = vpop.f32.mrb[0].mxu0
    %v312 = vadd.f32 0.0, %v311
    %v313 = vpop.f32.mrb[0].mxu0
    %v314 = vpop.f32.mrb[0].mxu0
    %v315 = vadd.f32 0.0, %v314
    %v316 = vpop.f32.mrb[0].mxu0
    %317 = vmatprep.mubr.bf16.mxu0 0
    %318 = vmatmul.mubr.bf16.gmra.mrb[0].mxu0 %v172
    %v319 = vpop.f32.mrb[0].mxu0
    %v320 = vadd.f32 0.0, %v319
    %v321 = vpop.f32.mrb[0].mxu0
    %v322 = vpop.f32.mrb[0].mxu0
    %v323 = vadd.f32 0.0, %v322
    %v324 = vpop.f32.mrb[0].mxu0
    %325 = vdwg.mxu0
    %v326 = vpack.c.bf16 %v267, %v264
    %v327 = vpack.c.bf16 %v275, %v272
    %v328 = vpack.c.bf16 %v283, %v280
    %v329 = vpack.c.bf16 %v291, %v288
    %v330 = vpack.c.bf16 %v299, %v296
    %v331 = vpack.c.bf16 %v307, %v304
    %v332 = vpack.c.bf16 %v315, %v312
    %v333 = vpack.c.bf16 %v323, %v320
    %v334 = vld [vmem:[#allocation2] sm:$0xf]
    %v335 = vld [vmem:[#allocation2 + $0x4] sm:$0xf]
    %v336 = vld [vmem:[#allocation2 + $0x8] sm:$0xf]
    %v337 = vld [vmem:[#allocation2 + $0xc] sm:$0xf]
    %v338 = vld [vmem:[#allocation2 + $0x10] sm:$0xf]
    %v339 = vld [vmem:[#allocation2 + $0x14] sm:$0xf]
    %v340 = vld [vmem:[#allocation2 + $0x18] sm:$0xf]
    %v341 = vld [vmem:[#allocation2 + $0x1c] sm:$0xf]
    %v342 = vld [vmem:[#allocation2 + $0x20] sm:$0xf]
    %v343 = vld [vmem:[#allocation2 + $0x24] sm:$0xf]
    %v344 = vld [vmem:[#allocation2 + $0x28] sm:$0xf]
    %v345 = vld [vmem:[#allocation2 + $0x2c] sm:$0xf]
    %v346 = vld [vmem:[#allocation2 + $0x30] sm:$0xf]
    %v347 = vld [vmem:[#allocation2 + $0x34] sm:$0xf]
    %v348 = vld [vmem:[#allocation2 + $0x38] sm:$0xf]
    %v349 = vld [vmem:[#allocation2 + $0x3c] sm:$0xf]
    %v350 = vld [vmem:[#allocation5] sm:$0xf]
    %v351 = vld [vmem:[#allocation5 + $0x4] sm:$0xf]
    %v352 = vld [vmem:[#allocation5 + $0x8] sm:$0xf]
    %v353 = vld [vmem:[#allocation5 + $0xc] sm:$0xf]
    %v354 = vld [vmem:[#allocation5 + $0x10] sm:$0xf]
    %v355 = vld [vmem:[#allocation5 + $0x14] sm:$0xf]
    %v356 = vld [vmem:[#allocation5 + $0x18] sm:$0xf]
    %v357 = vld [vmem:[#allocation5 + $0x1c] sm:$0xf]
    %v358 = vld [vmem:[#allocation5 + $0x20] sm:$0xf]
    %v359 = vld [vmem:[#allocation5 + $0x24] sm:$0xf]
    %v360 = vld [vmem:[#allocation5 + $0x28] sm:$0xf]
    %v361 = vld [vmem:[#allocation5 + $0x2c] sm:$0xf]
    %v362 = vld [vmem:[#allocation5 + $0x30] sm:$0xf]
    %v363 = vld [vmem:[#allocation5 + $0x34] sm:$0xf]
    %v364 = vld [vmem:[#allocation5 + $0x38] sm:$0xf]
    %v365 = vld [vmem:[#allocation5 + $0x3c] sm:$0xf]
    %v382 = vunpack.c.l.b16 %v350
    %v383 = vunpack.c.l.b16 %v351
    %v384 = vunpack.c.l.b16 %v352
    %v385 = vunpack.c.l.b16 %v353
    %v386 = vunpack.c.l.b16 %v354
    %v387 = vunpack.c.l.b16 %v355
    %v388 = vunpack.c.l.b16 %v356
    %v389 = vunpack.c.l.b16 %v357
    %v390 = vunpack.c.l.b16 %v358
    %v391 = vunpack.c.l.b16 %v359
    %v392 = vunpack.c.l.b16 %v360
    %v393 = vunpack.c.l.b16 %v361
    %v394 = vunpack.c.l.b16 %v362
    %v395 = vunpack.c.l.b16 %v363
    %v396 = vunpack.c.l.b16 %v364
    %v397 = vunpack.c.l.b16 %v365
    %v398 = vpack.c.b16 %v383, %v382
    %v399 = vpack.c.b16 %v385, %v384
    %v400 = vpack.c.b16 %v387, %v386
    %v401 = vpack.c.b16 %v389, %v388
    %v402 = vpack.c.b16 %v391, %v390
    %v403 = vpack.c.b16 %v393, %v392
    %v404 = vpack.c.b16 %v395, %v394
    %v405 = vpack.c.b16 %v397, %v396
    %414 = vmatprep.subr.bf16.mxu0 0
    %415 = vmatpush1.bf16.msra.mxu0 %v398
    %416 = vmatprep.subr.bf16.mxu0 0
    %417 = vmatpush1.bf16.msra.mxu0 %v399
    %418 = vmatprep.subr.bf16.mxu0 0
    %419 = vmatpush1.bf16.msra.mxu0 %v400
    %420 = vmatprep.subr.bf16.mxu0 0
    %421 = vmatpush1.bf16.msra.mxu0 %v401
    %422 = vmatprep.subr.bf16.mxu0 0
    %423 = vmatpush1.bf16.msra.mxu0 %v402
    %424 = vmatprep.subr.bf16.mxu0 0
    %425 = vmatpush1.bf16.msra.mxu0 %v403
    %426 = vmatprep.subr.bf16.mxu0 0
    %427 = vmatpush1.bf16.msra.mxu0 %v404
    %428 = vmatprep.subr.bf16.mxu0 0
    %429 = vmatpush1.bf16.msra.mxu0 %v405
    %430 = vmatprep.subr.bf16.mxu0 0
    %431 = vmatpush1.bf16.msra.mxu0 0
    %432 = vmatprep.subr.bf16.mxu0 0
    %433 = vmatpush1.bf16.msra.mxu0 0
    %434 = vmatprep.subr.bf16.mxu0 0
    %435 = vmatpush1.bf16.msra.mxu0 0
    %436 = vmatprep.subr.bf16.mxu0 0
    %437 = vmatpush1.bf16.msra.mxu0 0
    %438 = vmatprep.subr.bf16.mxu0 0
    %439 = vmatpush1.bf16.msra.mxu0 0
    %440 = vmatprep.subr.bf16.mxu0 0
    %441 = vmatpush1.bf16.msra.mxu0 0
    %442 = vmatprep.subr.bf16.mxu0 0
    %443 = vmatpush1.bf16.msra.mxu0 0
    %444 = vmatprep.subr.bf16.mxu0 0
    %445 = vmatpush1.bf16.msra.mxu0 0
    %446 = vmatprep.mubr.bf16.mxu0 0
    %447 = vmatmul.mubr.bf16.gmra.mrb[0].mxu0 %v213
    %v448 = vpop.f32.mrb[0].mxu0
    %v449 = vadd.f32 0.0, %v448
    %v450 = vpop.f32.mrb[0].mxu0
    %v451 = vpop.f32.mrb[0].mxu0
    %v452 = vadd.f32 0.0, %v451
    %v453 = vpop.f32.mrb[0].mxu0
    %454 = vmatprep.mubr.bf16.mxu0 0
    %455 = vmatmul.mubr.bf16.gmra.mrb[0].mxu0 %v214
    %v456 = vpop.f32.mrb[0].mxu0
    %v457 = vadd.f32 0.0, %v456
    %v458 = vpop.f32.mrb[0].mxu0
    %v459 = vpop.f32.mrb[0].mxu0
    %v460 = vadd.f32 0.0, %v459
    %v461 = vpop.f32.mrb[0].mxu0
    %462 = vmatprep.mubr.bf16.mxu0 0
    %463 = vmatmul.mubr.bf16.gmra.mrb[0].mxu0 %v215
    %v464 = vpop.f32.mrb[0].mxu0
    %v465 = vadd.f32 0.0, %v464
    %v466 = vpop.f32.mrb[0].mxu0
    %v467 = vpop.f32.mrb[0].mxu0
    %v468 = vadd.f32 0.0, %v467
    %v469 = vpop.f32.mrb[0].mxu0
    %470 = vmatprep.mubr.bf16.mxu0 0
    %471 = vmatmul.mubr.bf16.gmra.mrb[0].mxu0 %v216
    %v472 = vpop.f32.mrb[0].mxu0
    %v473 = vadd.f32 0.0, %v472
    %v474 = vpop.f32.mrb[0].mxu0
    %v475 = vpop.f32.mrb[0].mxu0
    %v476 = vadd.f32 0.0, %v475
    %v477 = vpop.f32.mrb[0].mxu0
    %478 = vmatprep.mubr.bf16.mxu0 0
    %479 = vmatmul.mubr.bf16.gmra.mrb[0].mxu0 %v217
    %v480 = vpop.f32.mrb[0].mxu0
    %v481 = vadd.f32 0.0, %v480
    %v482 = vpop.f32.mrb[0].mxu0
    %v483 = vpop.f32.mrb[0].mxu0
    %v484 = vadd.f32 0.0, %v483
    %v485 = vpop.f32.mrb[0].mxu0
    %486 = vmatprep.mubr.bf16.mxu0 0
    %487 = vmatmul.mubr.bf16.gmra.mrb[0].mxu0 %v218
    %v488 = vpop.f32.mrb[0].mxu0
    %v489 = vadd.f32 0.0, %v488
    %v490 = vpop.f32.mrb[0].mxu0
    %v491 = vpop.f32.mrb[0].mxu0
    %v492 = vadd.f32 0.0, %v491
    %v493 = vpop.f32.mrb[0].mxu0
    %494 = vmatprep.mubr.bf16.mxu0 0
    %495 = vmatmul.mubr.bf16.gmra.mrb[0].mxu0 %v219
    %v496 = vpop.f32.mrb[0].mxu0
    %v497 = vadd.f32 0.0, %v496
    %v498 = vpop.f32.mrb[0].mxu0
    %v499 = vpop.f32.mrb[0].mxu0
    %v500 = vadd.f32 0.0, %v499
    %v501 = vpop.f32.mrb[0].mxu0
    %502 = vmatprep.mubr.bf16.mxu0 0
    %503 = vmatmul.mubr.bf16.gmra.mrb[0].mxu0 %v220
    %v504 = vpop.f32.mrb[0].mxu0
    %v505 = vadd.f32 0.0, %v504
    %v506 = vpop.f32.mrb[0].mxu0
    %v507 = vpop.f32.mrb[0].mxu0
    %v508 = vadd.f32 0.0, %v507
    %v509 = vpop.f32.mrb[0].mxu0
    %510 = vdwg.mxu0
    %v527 = vunpack.c.l.b16 %v334
    %v528 = vunpack.c.l.b16 %v335
    %v529 = vunpack.c.l.b16 %v336
    %v530 = vunpack.c.l.b16 %v337
    %v531 = vunpack.c.l.b16 %v338
    %v532 = vunpack.c.l.b16 %v339
    %v533 = vunpack.c.l.b16 %v340
    %v534 = vunpack.c.l.b16 %v341
    %v535 = vunpack.c.l.b16 %v342
    %v536 = vunpack.c.l.b16 %v343
    %v537 = vunpack.c.l.b16 %v344
    %v538 = vunpack.c.l.b16 %v345
    %v539 = vunpack.c.l.b16 %v346
    %v540 = vunpack.c.l.b16 %v347
    %v541 = vunpack.c.l.b16 %v348
    %v542 = vunpack.c.l.b16 %v349
    %v543 = vpack.c.b16 %v528, %v527
    %v544 = vpack.c.b16 %v530, %v529
    %v545 = vpack.c.b16 %v532, %v531
    %v546 = vpack.c.b16 %v534, %v533
    %v547 = vpack.c.b16 %v536, %v535
    %v548 = vpack.c.b16 %v538, %v537
    %v549 = vpack.c.b16 %v540, %v539
    %v550 = vpack.c.b16 %v542, %v541
    %559 = vmatprep.subr.bf16.mxu0 0
    %560 = vmatpush1.bf16.msra.mxu0 %v543
    %561 = vmatprep.subr.bf16.mxu0 0
    %562 = vmatpush1.bf16.msra.mxu0 %v544
    %563 = vmatprep.subr.bf16.mxu0 0
    %564 = vmatpush1.bf16.msra.mxu0 %v545
    %565 = vmatprep.subr.bf16.mxu0 0
    %566 = vmatpush1.bf16.msra.mxu0 %v546
    %567 = vmatprep.subr.bf16.mxu0 0
    %568 = vmatpush1.bf16.msra.mxu0 %v547
    %569 = vmatprep.subr.bf16.mxu0 0
    %570 = vmatpush1.bf16.msra.mxu0 %v548
    %571 = vmatprep.subr.bf16.mxu0 0
    %572 = vmatpush1.bf16.msra.mxu0 %v549
    %573 = vmatprep.subr.bf16.mxu0 0
    %574 = vmatpush1.bf16.msra.mxu0 %v550
    %575 = vmatprep.subr.bf16.mxu0 0
    %576 = vmatpush1.bf16.msra.mxu0 0
    %577 = vmatprep.subr.bf16.mxu0 0
    %578 = vmatpush1.bf16.msra.mxu0 0
    %579 = vmatprep.subr.bf16.mxu0 0
    %580 = vmatpush1.bf16.msra.mxu0 0
    %581 = vmatprep.subr.bf16.mxu0 0
    %582 = vmatpush1.bf16.msra.mxu0 0
    %583 = vmatprep.subr.bf16.mxu0 0
    %584 = vmatpush1.bf16.msra.mxu0 0
    %585 = vmatprep.subr.bf16.mxu0 0
    %586 = vmatpush1.bf16.msra.mxu0 0
    %587 = vmatprep.subr.bf16.mxu0 0
    %588 = vmatpush1.bf16.msra.mxu0 0
    %589 = vmatprep.subr.bf16.mxu0 0
    %590 = vmatpush1.bf16.msra.mxu0 0
    %591 = vmatprep.mubr.bf16.mxu0 0
    %592 = vmatmul.mubr.bf16.gmra.mrb[0].mxu0 %v326
    %v593 = vpop.f32.mrb[0].mxu0
    %v594 = vadd.f32 %v449, %v593
    %v595 = vpop.f32.mrb[0].mxu0
    %v596 = vpop.f32.mrb[0].mxu0
    %v597 = vadd.f32 %v452, %v596
    %v598 = vpop.f32.mrb[0].mxu0
    %599 = vmatprep.mubr.bf16.mxu0 0
    %600 = vmatmul.mubr.bf16.gmra.mrb[0].mxu0 %v327
    %v601 = vpop.f32.mrb[0].mxu0
    %v602 = vadd.f32 %v457, %v601
    %v603 = vpop.f32.mrb[0].mxu0
    %v604 = vpop.f32.mrb[0].mxu0
    %v605 = vadd.f32 %v460, %v604
    %v606 = vpop.f32.mrb[0].mxu0
    %607 = vmatprep.mubr.bf16.mxu0 0
    %608 = vmatmul.mubr.bf16.gmra.mrb[0].mxu0 %v328
    %v609 = vpop.f32.mrb[0].mxu0
    %v610 = vadd.f32 %v465, %v609
    %v611 = vpop.f32.mrb[0].mxu0
    %v612 = vpop.f32.mrb[0].mxu0
    %v613 = vadd.f32 %v468, %v612
    %v614 = vpop.f32.mrb[0].mxu0
    %615 = vmatprep.mubr.bf16.mxu0 0
    %616 = vmatmul.mubr.bf16.gmra.mrb[0].mxu0 %v329
    %v617 = vpop.f32.mrb[0].mxu0
    %v618 = vadd.f32 %v473, %v617
    %v619 = vpop.f32.mrb[0].mxu0
    %v620 = vpop.f32.mrb[0].mxu0
    %v621 = vadd.f32 %v476, %v620
    %v622 = vpop.f32.mrb[0].mxu0
    %623 = vmatprep.mubr.bf16.mxu0 0
    %624 = vmatmul.mubr.bf16.gmra.mrb[0].mxu0 %v330
    %v625 = vpop.f32.mrb[0].mxu0
    %v626 = vadd.f32 %v481, %v625
    %v627 = vpop.f32.mrb[0].mxu0
    %v628 = vpop.f32.mrb[0].mxu0
    %v629 = vadd.f32 %v484, %v628
    %v630 = vpop.f32.mrb[0].mxu0
    %631 = vmatprep.mubr.bf16.mxu0 0
    %632 = vmatmul.mubr.bf16.gmra.mrb[0].mxu0 %v331
    %v633 = vpop.f32.mrb[0].mxu0
    %v634 = vadd.f32 %v489, %v633
    %v635 = vpop.f32.mrb[0].mxu0
    %v636 = vpop.f32.mrb[0].mxu0
    %v637 = vadd.f32 %v492, %v636
    %v638 = vpop.f32.mrb[0].mxu0
    %639 = vmatprep.mubr.bf16.mxu0 0
    %640 = vmatmul.mubr.bf16.gmra.mrb[0].mxu0 %v332
    %v641 = vpop.f32.mrb[0].mxu0
    %v642 = vadd.f32 %v497, %v641
    %v643 = vpop.f32.mrb[0].mxu0
    %v644 = vpop.f32.mrb[0].mxu0
    %v645 = vadd.f32 %v500, %v644
    %v646 = vpop.f32.mrb[0].mxu0
    %647 = vmatprep.mubr.bf16.mxu0 0
    %648 = vmatmul.mubr.bf16.gmra.mrb[0].mxu0 %v333
    %v649 = vpop.f32.mrb[0].mxu0
    %v650 = vadd.f32 %v505, %v649
    %v651 = vpop.f32.mrb[0].mxu0
    %v652 = vpop.f32.mrb[0].mxu0
    %v653 = vadd.f32 %v508, %v652
    %v654 = vpop.f32.mrb[0].mxu0
    %655 = vdwg.mxu0
    %v656 = vld [vmem:[%s4] sm:$0x1]
    %v658 = vlaneseq
    %v659 = vshrl.u32 %v658, 7
    %v660 = vsub.s32 0, %v659
    %v661 = vrot.slane %v656, %v660
    %v663 = vadd.f32 %v594, %v661
    %v664 = vadd.f32 %v597, %v661
    %v665 = vadd.f32 %v602, %v661
    %v666 = vadd.f32 %v605, %v661
    %v667 = vadd.f32 %v610, %v661
    %v668 = vadd.f32 %v613, %v661
    %v669 = vadd.f32 %v618, %v661
    %v670 = vadd.f32 %v621, %v661
    %v671 = vadd.f32 %v626, %v661
    %v672 = vadd.f32 %v629, %v661
    %v673 = vadd.f32 %v634, %v661
    %v674 = vadd.f32 %v637, %v661
    %v675 = vadd.f32 %v642, %v661
    %v676 = vadd.f32 %v645, %v661
    %v677 = vadd.f32 %v650, %v661
    %v678 = vadd.f32 %v653, %v661
    %v679 = vmax.f32 %v663, 0.0
    %v680 = vmax.f32 %v664, 0.0
    %v681 = vmax.f32 %v665, 0.0
    %v682 = vmax.f32 %v666, 0.0
    %v683 = vmax.f32 %v667, 0.0
    %v684 = vmax.f32 %v668, 0.0
    %v685 = vmax.f32 %v669, 0.0
    %v686 = vmax.f32 %v670, 0.0
    %v687 = vmax.f32 %v671, 0.0
    %v688 = vmax.f32 %v672, 0.0
    %v689 = vmax.f32 %v673, 0.0
    %v690 = vmax.f32 %v674, 0.0
    %v691 = vmax.f32 %v675, 0.0
    %v692 = vmax.f32 %v676, 0.0
    %v693 = vmax.f32 %v677, 0.0
    %v694 = vmax.f32 %v678, 0.0
    %v695 = vpack.c.bf16 %v680, %v679
    %v696 = vpack.c.bf16 %v682, %v681
    %v697 = vpack.c.bf16 %v684, %v683
    %v698 = vpack.c.bf16 %v686, %v685
    %v699 = vpack.c.bf16 %v688, %v687
    %v700 = vpack.c.bf16 %v690, %v689
    %v701 = vpack.c.bf16 %v692, %v691
    %v702 = vpack.c.bf16 %v694, %v693
    %703 = vmatprep.subr.bf16.mxu0 0
    %704 = vmatpush1.bf16.msra.mxu0 %v695
    %705 = vmatprep.subr.bf16.mxu0 0
    %706 = vmatpush1.bf16.msra.mxu0 %v696
    %707 = vmatprep.subr.bf16.mxu0 0
    %708 = vmatpush1.bf16.msra.mxu0 %v697
    %709 = vmatprep.subr.bf16.mxu0 0
    %710 = vmatpush1.bf16.msra.mxu0 %v698
    %711 = vmatprep.subr.bf16.mxu0 0
    %712 = vmatpush1.bf16.msra.mxu0 %v699
    %713 = vmatprep.subr.bf16.mxu0 0
    %714 = vmatpush1.bf16.msra.mxu0 %v700
    %715 = vmatprep.subr.bf16.mxu0 0
    %716 = vmatpush1.bf16.msra.mxu0 %v701
    %717 = vmatprep.subr.bf16.mxu0 0
    %718 = vmatpush1.bf16.msra.mxu0 %v702
    %719 = vmatprep.subr.bf16.mxu0 0
    %720 = vmatpush1.bf16.msra.mxu0 0
    %721 = vmatprep.subr.bf16.mxu0 0
    %722 = vmatpush1.bf16.msra.mxu0 0
    %723 = vmatprep.subr.bf16.mxu0 0
    %724 = vmatpush1.bf16.msra.mxu0 0
    %725 = vmatprep.subr.bf16.mxu0 0
    %726 = vmatpush1.bf16.msra.mxu0 0
    %727 = vmatprep.subr.bf16.mxu0 0
    %728 = vmatpush1.bf16.msra.mxu0 0
    %729 = vmatprep.subr.bf16.mxu0 0
    %730 = vmatpush1.bf16.msra.mxu0 0
    %731 = vmatprep.subr.bf16.mxu0 0
    %732 = vmatpush1.bf16.msra.mxu0 0
    %733 = vmatprep.subr.bf16.mxu0 0
    %734 = vmatpush1.bf16.msra.mxu0 0
    %735 = vmatprep.mubr.bf16.mxu0 0
    %736 = vmatmul.mubr.bf16.gmra.mrb[0].mxu0 %v165
    %v737 = vpop.f32.mrb[0].mxu0
    %v738 = vadd.f32 0.0, %v737
    %v739 = vpop.f32.mrb[0].mxu0
    %v740 = vpop.f32.mrb[0].mxu0
    %v741 = vadd.f32 0.0, %v740
    %v742 = vpop.f32.mrb[0].mxu0
    %743 = vmatprep.mubr.bf16.mxu0 0
    %744 = vmatmul.mubr.bf16.gmra.mrb[0].mxu0 %v166
    %v745 = vpop.f32.mrb[0].mxu0
    %v746 = vadd.f32 0.0, %v745
    %v747 = vpop.f32.mrb[0].mxu0
    %v748 = vpop.f32.mrb[0].mxu0
    %v749 = vadd.f32 0.0, %v748
    %v750 = vpop.f32.mrb[0].mxu0
    %751 = vmatprep.mubr.bf16.mxu0 0
    %752 = vmatmul.mubr.bf16.gmra.mrb[0].mxu0 %v167
    %v753 = vpop.f32.mrb[0].mxu0
    %v754 = vadd.f32 0.0, %v753
    %v755 = vpop.f32.mrb[0].mxu0
    %v756 = vpop.f32.mrb[0].mxu0
    %v757 = vadd.f32 0.0, %v756
    %v758 = vpop.f32.mrb[0].mxu0
    %759 = vmatprep.mubr.bf16.mxu0 0
    %760 = vmatmul.mubr.bf16.gmra.mrb[0].mxu0 %v168
    %v761 = vpop.f32.mrb[0].mxu0
    %v762 = vadd.f32 0.0, %v761
    %v763 = vpop.f32.mrb[0].mxu0
    %v764 = vpop.f32.mrb[0].mxu0
    %v765 = vadd.f32 0.0, %v764
    %v766 = vpop.f32.mrb[0].mxu0
    %767 = vmatprep.mubr.bf16.mxu0 0
    %768 = vmatmul.mubr.bf16.gmra.mrb[0].mxu0 %v169
    %v769 = vpop.f32.mrb[0].mxu0
    %v770 = vadd.f32 0.0, %v769
    %v771 = vpop.f32.mrb[0].mxu0
    %v772 = vpop.f32.mrb[0].mxu0
    %v773 = vadd.f32 0.0, %v772
    %v774 = vpop.f32.mrb[0].mxu0
    %775 = vmatprep.mubr.bf16.mxu0 0
    %776 = vmatmul.mubr.bf16.gmra.mrb[0].mxu0 %v170
    %v777 = vpop.f32.mrb[0].mxu0
    %v778 = vadd.f32 0.0, %v777
    %v779 = vpop.f32.mrb[0].mxu0
    %v780 = vpop.f32.mrb[0].mxu0
    %v781 = vadd.f32 0.0, %v780
    %v782 = vpop.f32.mrb[0].mxu0
    %783 = vmatprep.mubr.bf16.mxu0 0
    %784 = vmatmul.mubr.bf16.gmra.mrb[0].mxu0 %v171
    %v785 = vpop.f32.mrb[0].mxu0
    %v786 = vadd.f32 0.0, %v785
    %v787 = vpop.f32.mrb[0].mxu0
    %v788 = vpop.f32.mrb[0].mxu0
    %v789 = vadd.f32 0.0, %v788
    %v790 = vpop.f32.mrb[0].mxu0
    %791 = vmatprep.mubr.bf16.mxu0 0
    %792 = vmatmul.mubr.bf16.gmra.mrb[0].mxu0 %v172
    %v793 = vpop.f32.mrb[0].mxu0
    %v794 = vadd.f32 0.0, %v793
    %v795 = vpop.f32.mrb[0].mxu0
    %v796 = vpop.f32.mrb[0].mxu0
    %v797 = vadd.f32 0.0, %v796
    %v798 = vpop.f32.mrb[0].mxu0
    %799 = vdwg.mxu0
    %v800 = vpack.c.bf16 %v741, %v738
    %v801 = vpack.c.bf16 %v749, %v746
    %v802 = vpack.c.bf16 %v757, %v754
    %v803 = vpack.c.bf16 %v765, %v762
    %v804 = vpack.c.bf16 %v773, %v770
    %v805 = vpack.c.bf16 %v781, %v778
    %v806 = vpack.c.bf16 %v789, %v786
    %v807 = vpack.c.bf16 %v797, %v794
    %v808 = vld [vmem:[#allocation7] sm:$0xf]
    %v809 = vld [vmem:[#allocation7 + $0x4] sm:$0xf]
    %v810 = vld [vmem:[#allocation7 + $0x8] sm:$0xf]
    %v811 = vld [vmem:[#allocation7 + $0xc] sm:$0xf]
    %v812 = vld [vmem:[#allocation7 + $0x10] sm:$0xf]
    %v813 = vld [vmem:[#allocation7 + $0x14] sm:$0xf]
    %v814 = vld [vmem:[#allocation7 + $0x18] sm:$0xf]
    %v815 = vld [vmem:[#allocation7 + $0x1c] sm:$0xf]
    %v816 = vld [vmem:[#allocation7 + $0x20] sm:$0xf]
    %v817 = vld [vmem:[#allocation7 + $0x24] sm:$0xf]
    %v818 = vld [vmem:[#allocation7 + $0x28] sm:$0xf]
    %v819 = vld [vmem:[#allocation7 + $0x2c] sm:$0xf]
    %v820 = vld [vmem:[#allocation7 + $0x30] sm:$0xf]
    %v821 = vld [vmem:[#allocation7 + $0x34] sm:$0xf]
    %v822 = vld [vmem:[#allocation7 + $0x38] sm:$0xf]
    %v823 = vld [vmem:[#allocation7 + $0x3c] sm:$0xf]
    %v824 = vld [vmem:[#allocation8] sm:$0xf]
    %v825 = vld [vmem:[#allocation8 + $0x4] sm:$0xf]
    %v826 = vld [vmem:[#allocation8 + $0x8] sm:$0xf]
    %v827 = vld [vmem:[#allocation8 + $0xc] sm:$0xf]
    %v828 = vld [vmem:[#allocation8 + $0x10] sm:$0xf]
    %v829 = vld [vmem:[#allocation8 + $0x14] sm:$0xf]
    %v830 = vld [vmem:[#allocation8 + $0x18] sm:$0xf]
    %v831 = vld [vmem:[#allocation8 + $0x1c] sm:$0xf]
    %v832 = vld [vmem:[#allocation8 + $0x20] sm:$0xf]
    %v833 = vld [vmem:[#allocation8 + $0x24] sm:$0xf]
    %v834 = vld [vmem:[#allocation8 + $0x28] sm:$0xf]
    %v835 = vld [vmem:[#allocation8 + $0x2c] sm:$0xf]
    %v836 = vld [vmem:[#allocation8 + $0x30] sm:$0xf]
    %v837 = vld [vmem:[#allocation8 + $0x34] sm:$0xf]
    %v838 = vld [vmem:[#allocation8 + $0x38] sm:$0xf]
    %v839 = vld [vmem:[#allocation8 + $0x3c] sm:$0xf]
    %v856 = vunpack.c.l.b16 %v824
    %v857 = vunpack.c.l.b16 %v825
    %v858 = vunpack.c.l.b16 %v826
    %v859 = vunpack.c.l.b16 %v827
    %v860 = vunpack.c.l.b16 %v828
    %v861 = vunpack.c.l.b16 %v829
    %v862 = vunpack.c.l.b16 %v830
    %v863 = vunpack.c.l.b16 %v831
    %v864 = vunpack.c.l.b16 %v832
    %v865 = vunpack.c.l.b16 %v833
    %v866 = vunpack.c.l.b16 %v834
    %v867 = vunpack.c.l.b16 %v835
    %v868 = vunpack.c.l.b16 %v836
    %v869 = vunpack.c.l.b16 %v837
    %v870 = vunpack.c.l.b16 %v838
    %v871 = vunpack.c.l.b16 %v839
    %v872 = vpack.c.b16 %v857, %v856
    %v873 = vpack.c.b16 %v859, %v858
    %v874 = vpack.c.b16 %v861, %v860
    %v875 = vpack.c.b16 %v863, %v862
    %v876 = vpack.c.b16 %v865, %v864
    %v877 = vpack.c.b16 %v867, %v866
    %v878 = vpack.c.b16 %v869, %v868
    %v879 = vpack.c.b16 %v871, %v870
    %888 = vmatprep.subr.bf16.mxu0 0
    %889 = vmatpush1.bf16.msra.mxu0 %v872
    %890 = vmatprep.subr.bf16.mxu0 0
    %891 = vmatpush1.bf16.msra.mxu0 %v873
    %892 = vmatprep.subr.bf16.mxu0 0
    %893 = vmatpush1.bf16.msra.mxu0 %v874
    %894 = vmatprep.subr.bf16.mxu0 0
    %895 = vmatpush1.bf16.msra.mxu0 %v875
    %896 = vmatprep.subr.bf16.mxu0 0
    %897 = vmatpush1.bf16.msra.mxu0 %v876
    %898 = vmatprep.subr.bf16.mxu0 0
    %899 = vmatpush1.bf16.msra.mxu0 %v877
    %900 = vmatprep.subr.bf16.mxu0 0
    %901 = vmatpush1.bf16.msra.mxu0 %v878
    %902 = vmatprep.subr.bf16.mxu0 0
    %903 = vmatpush1.bf16.msra.mxu0 %v879
    %904 = vmatprep.subr.bf16.mxu0 0
    %905 = vmatpush1.bf16.msra.mxu0 0
    %906 = vmatprep.subr.bf16.mxu0 0
    %907 = vmatpush1.bf16.msra.mxu0 0
    %908 = vmatprep.subr.bf16.mxu0 0
    %909 = vmatpush1.bf16.msra.mxu0 0
    %910 = vmatprep.subr.bf16.mxu0 0
    %911 = vmatpush1.bf16.msra.mxu0 0
    %912 = vmatprep.subr.bf16.mxu0 0
    %913 = vmatpush1.bf16.msra.mxu0 0
    %914 = vmatprep.subr.bf16.mxu0 0
    %915 = vmatpush1.bf16.msra.mxu0 0
    %916 = vmatprep.subr.bf16.mxu0 0
    %917 = vmatpush1.bf16.msra.mxu0 0
    %918 = vmatprep.subr.bf16.mxu0 0
    %919 = vmatpush1.bf16.msra.mxu0 0
    %920 = vmatprep.mubr.bf16.mxu0 0
    %921 = vmatmul.mubr.bf16.gmra.mrb[0].mxu0 %v695
    %v922 = vpop.f32.mrb[0].mxu0
    %v923 = vadd.f32 0.0, %v922
    %v924 = vpop.f32.mrb[0].mxu0
    %v925 = vpop.f32.mrb[0].mxu0
    %v926 = vadd.f32 0.0, %v925
    %v927 = vpop.f32.mrb[0].mxu0
    %928 = vmatprep.mubr.bf16.mxu0 0
    %929 = vmatmul.mubr.bf16.gmra.mrb[0].mxu0 %v696
    %v930 = vpop.f32.mrb[0].mxu0
    %v931 = vadd.f32 0.0, %v930
    %v932 = vpop.f32.mrb[0].mxu0
    %v933 = vpop.f32.mrb[0].mxu0
    %v934 = vadd.f32 0.0, %v933
    %v935 = vpop.f32.mrb[0].mxu0
    %936 = vmatprep.mubr.bf16.mxu0 0
    %937 = vmatmul.mubr.bf16.gmra.mrb[0].mxu0 %v697
    %v938 = vpop.f32.mrb[0].mxu0
    %v939 = vadd.f32 0.0, %v938
    %v940 = vpop.f32.mrb[0].mxu0
    %v941 = vpop.f32.mrb[0].mxu0
    %v942 = vadd.f32 0.0, %v941
    %v943 = vpop.f32.mrb[0].mxu0
    %944 = vmatprep.mubr.bf16.mxu0 0
    %945 = vmatmul.mubr.bf16.gmra.mrb[0].mxu0 %v698
    %v946 = vpop.f32.mrb[0].mxu0
    %v947 = vadd.f32 0.0, %v946
    %v948 = vpop.f32.mrb[0].mxu0
    %v949 = vpop.f32.mrb[0].mxu0
    %v950 = vadd.f32 0.0, %v949
    %v951 = vpop.f32.mrb[0].mxu0
    %952 = vmatprep.mubr.bf16.mxu0 0
    %953 = vmatmul.mubr.bf16.gmra.mrb[0].mxu0 %v699
    %v954 = vpop.f32.mrb[0].mxu0
    %v955 = vadd.f32 0.0, %v954
    %v956 = vpop.f32.mrb[0].mxu0
    %v957 = vpop.f32.mrb[0].mxu0
    %v958 = vadd.f32 0.0, %v957
    %v959 = vpop.f32.mrb[0].mxu0
    %960 = vmatprep.mubr.bf16.mxu0 0
    %961 = vmatmul.mubr.bf16.gmra.mrb[0].mxu0 %v700
    %v962 = vpop.f32.mrb[0].mxu0
    %v963 = vadd.f32 0.0, %v962
    %v964 = vpop.f32.mrb[0].mxu0
    %v965 = vpop.f32.mrb[0].mxu0
    %v966 = vadd.f32 0.0, %v965
    %v967 = vpop.f32.mrb[0].mxu0
    %968 = vmatprep.mubr.bf16.mxu0 0
    %969 = vmatmul.mubr.bf16.gmra.mrb[0].mxu0 %v701
    %v970 = vpop.f32.mrb[0].mxu0
    %v971 = vadd.f32 0.0, %v970
    %v972 = vpop.f32.mrb[0].mxu0
    %v973 = vpop.f32.mrb[0].mxu0
    %v974 = vadd.f32 0.0, %v973
    %v975 = vpop.f32.mrb[0].mxu0
    %976 = vmatprep.mubr.bf16.mxu0 0
    %977 = vmatmul.mubr.bf16.gmra.mrb[0].mxu0 %v702
    %v978 = vpop.f32.mrb[0].mxu0
    %v979 = vadd.f32 0.0, %v978
    %v980 = vpop.f32.mrb[0].mxu0
    %v981 = vpop.f32.mrb[0].mxu0
    %v982 = vadd.f32 0.0, %v981
    %v983 = vpop.f32.mrb[0].mxu0
    %984 = vdwg.mxu0
    %v1001 = vunpack.c.l.b16 %v808
    %v1002 = vunpack.c.l.b16 %v809
    %v1003 = vunpack.c.l.b16 %v810
    %v1004 = vunpack.c.l.b16 %v811
    %v1005 = vunpack.c.l.b16 %v812
    %v1006 = vunpack.c.l.b16 %v813
    %v1007 = vunpack.c.l.b16 %v814
    %v1008 = vunpack.c.l.b16 %v815
    %v1009 = vunpack.c.l.b16 %v816
    %v1010 = vunpack.c.l.b16 %v817
    %v1011 = vunpack.c.l.b16 %v818
    %v1012 = vunpack.c.l.b16 %v819
    %v1013 = vunpack.c.l.b16 %v820
    %v1014 = vunpack.c.l.b16 %v821
    %v1015 = vunpack.c.l.b16 %v822
    %v1016 = vunpack.c.l.b16 %v823
    %v1017 = vpack.c.b16 %v1002, %v1001
    %v1018 = vpack.c.b16 %v1004, %v1003
    %v1019 = vpack.c.b16 %v1006, %v1005
    %v1020 = vpack.c.b16 %v1008, %v1007
    %v1021 = vpack.c.b16 %v1010, %v1009
    %v1022 = vpack.c.b16 %v1012, %v1011
    %v1023 = vpack.c.b16 %v1014, %v1013
    %v1024 = vpack.c.b16 %v1016, %v1015
    %1033 = vmatprep.subr.bf16.mxu0 0
    %1034 = vmatpush1.bf16.msra.mxu0 %v1017
    %1035 = vmatprep.subr.bf16.mxu0 0
    %1036 = vmatpush1.bf16.msra.mxu0 %v1018
    %1037 = vmatprep.subr.bf16.mxu0 0
    %1038 = vmatpush1.bf16.msra.mxu0 %v1019
    %1039 = vmatprep.subr.bf16.mxu0 0
    %1040 = vmatpush1.bf16.msra.mxu0 %v1020
    %1041 = vmatprep.subr.bf16.mxu0 0
    %1042 = vmatpush1.bf16.msra.mxu0 %v1021
    %1043 = vmatprep.subr.bf16.mxu0 0
    %1044 = vmatpush1.bf16.msra.mxu0 %v1022
    %1045 = vmatprep.subr.bf16.mxu0 0
    %1046 = vmatpush1.bf16.msra.mxu0 %v1023
    %1047 = vmatprep.subr.bf16.mxu0 0
    %1048 = vmatpush1.bf16.msra.mxu0 %v1024
    %1049 = vmatprep.subr.bf16.mxu0 0
    %1050 = vmatpush1.bf16.msra.mxu0 0
    %1051 = vmatprep.subr.bf16.mxu0 0
    %1052 = vmatpush1.bf16.msra.mxu0 0
    %1053 = vmatprep.subr.bf16.mxu0 0
    %1054 = vmatpush1.bf16.msra.mxu0 0
    %1055 = vmatprep.subr.bf16.mxu0 0
    %1056 = vmatpush1.bf16.msra.mxu0 0
    %1057 = vmatprep.subr.bf16.mxu0 0
    %1058 = vmatpush1.bf16.msra.mxu0 0
    %1059 = vmatprep.subr.bf16.mxu0 0
    %1060 = vmatpush1.bf16.msra.mxu0 0
    %1061 = vmatprep.subr.bf16.mxu0 0
    %1062 = vmatpush1.bf16.msra.mxu0 0
    %1063 = vmatprep.subr.bf16.mxu0 0
    %1064 = vmatpush1.bf16.msra.mxu0 0
    %1065 = vmatprep.mubr.bf16.mxu0 0
    %1066 = vmatmul.mubr.bf16.gmra.mrb[0].mxu0 %v800
    %v1067 = vpop.f32.mrb[0].mxu0
    %v1068 = vadd.f32 %v923, %v1067
    %v1069 = vpop.f32.mrb[0].mxu0
    %v1070 = vpop.f32.mrb[0].mxu0
    %v1071 = vadd.f32 %v926, %v1070
    %v1072 = vpop.f32.mrb[0].mxu0
    %1073 = vmatprep.mubr.bf16.mxu0 0
    %1074 = vmatmul.mubr.bf16.gmra.mrb[0].mxu0 %v801
    %v1075 = vpop.f32.mrb[0].mxu0
    %v1076 = vadd.f32 %v931, %v1075
    %v1077 = vpop.f32.mrb[0].mxu0
    %v1078 = vpop.f32.mrb[0].mxu0
    %v1079 = vadd.f32 %v934, %v1078
    %v1080 = vpop.f32.mrb[0].mxu0
    %1081 = vmatprep.mubr.bf16.mxu0 0
    %1082 = vmatmul.mubr.bf16.gmra.mrb[0].mxu0 %v802
    %v1083 = vpop.f32.mrb[0].mxu0
    %v1084 = vadd.f32 %v939, %v1083
    %v1085 = vpop.f32.mrb[0].mxu0
    %v1086 = vpop.f32.mrb[0].mxu0
    %v1087 = vadd.f32 %v942, %v1086
    %v1088 = vpop.f32.mrb[0].mxu0
    %1089 = vmatprep.mubr.bf16.mxu0 0
    %1090 = vmatmul.mubr.bf16.gmra.mrb[0].mxu0 %v803
    %v1091 = vpop.f32.mrb[0].mxu0
    %v1092 = vadd.f32 %v947, %v1091
    %v1093 = vpop.f32.mrb[0].mxu0
    %v1094 = vpop.f32.mrb[0].mxu0
    %v1095 = vadd.f32 %v950, %v1094
    %v1096 = vpop.f32.mrb[0].mxu0
    %1097 = vmatprep.mubr.bf16.mxu0 0
    %1098 = vmatmul.mubr.bf16.gmra.mrb[0].mxu0 %v804
    %v1099 = vpop.f32.mrb[0].mxu0
    %v1100 = vadd.f32 %v955, %v1099
    %v1101 = vpop.f32.mrb[0].mxu0
    %v1102 = vpop.f32.mrb[0].mxu0
    %v1103 = vadd.f32 %v958, %v1102
    %v1104 = vpop.f32.mrb[0].mxu0
    %1105 = vmatprep.mubr.bf16.mxu0 0
    %1106 = vmatmul.mubr.bf16.gmra.mrb[0].mxu0 %v805
    %v1107 = vpop.f32.mrb[0].mxu0
    %v1108 = vadd.f32 %v963, %v1107
    %v1109 = vpop.f32.mrb[0].mxu0
    %v1110 = vpop.f32.mrb[0].mxu0
    %v1111 = vadd.f32 %v966, %v1110
    %v1112 = vpop.f32.mrb[0].mxu0
    %1113 = vmatprep.mubr.bf16.mxu0 0
    %1114 = vmatmul.mubr.bf16.gmra.mrb[0].mxu0 %v806
    %v1115 = vpop.f32.mrb[0].mxu0
    %v1116 = vadd.f32 %v971, %v1115
    %v1117 = vpop.f32.mrb[0].mxu0
    %v1118 = vpop.f32.mrb[0].mxu0
    %v1119 = vadd.f32 %v974, %v1118
    %v1120 = vpop.f32.mrb[0].mxu0
    %1121 = vmatprep.mubr.bf16.mxu0 0
    %1122 = vmatmul.mubr.bf16.gmra.mrb[0].mxu0 %v807
    %v1123 = vpop.f32.mrb[0].mxu0
    %v1124 = vadd.f32 %v979, %v1123
    %v1125 = vpop.f32.mrb[0].mxu0
    %v1126 = vpop.f32.mrb[0].mxu0
    %v1127 = vadd.f32 %v982, %v1126
    %v1128 = vpop.f32.mrb[0].mxu0
    %1129 = vdwg.mxu0
    %v1130 = vld [vmem:[%s7] sm:$0x1]
    %v1132 = vlaneseq
    %v1133 = vshrl.u32 %v1132, 7
    %v1134 = vsub.s32 0, %v1133
    %v1135 = vrot.slane %v1130, %v1134
    %v1137 = vadd.f32 %v1068, %v1135
    %v1138 = vadd.f32 %v1071, %v1135
    %v1139 = vadd.f32 %v1076, %v1135
    %v1140 = vadd.f32 %v1079, %v1135
    %v1141 = vadd.f32 %v1084, %v1135
    %v1142 = vadd.f32 %v1087, %v1135
    %v1143 = vadd.f32 %v1092, %v1135
    %v1144 = vadd.f32 %v1095, %v1135
    %v1145 = vadd.f32 %v1100, %v1135
    %v1146 = vadd.f32 %v1103, %v1135
    %v1147 = vadd.f32 %v1108, %v1135
    %v1148 = vadd.f32 %v1111, %v1135
    %v1149 = vadd.f32 %v1116, %v1135
    %v1150 = vadd.f32 %v1119, %v1135
    %v1151 = vadd.f32 %v1124, %v1135
    %v1152 = vadd.f32 %v1127, %v1135
    %v1153 = vmax.f32 %v1137, 0.0
    %v1154 = vmax.f32 %v1138, 0.0
    %v1155 = vmax.f32 %v1139, 0.0
    %v1156 = vmax.f32 %v1140, 0.0
    %v1157 = vmax.f32 %v1141, 0.0
    %v1158 = vmax.f32 %v1142, 0.0
    %v1159 = vmax.f32 %v1143, 0.0
    %v1160 = vmax.f32 %v1144, 0.0
    %v1161 = vmax.f32 %v1145, 0.0
    %v1162 = vmax.f32 %v1146, 0.0
    %v1163 = vmax.f32 %v1147, 0.0
    %v1164 = vmax.f32 %v1148, 0.0
    %v1165 = vmax.f32 %v1149, 0.0
    %v1166 = vmax.f32 %v1150, 0.0
    %v1167 = vmax.f32 %v1151, 0.0
    %v1168 = vmax.f32 %v1152, 0.0
    %v1169 = vpack.c.bf16 %v1154, %v1153
    %v1170 = vpack.c.bf16 %v1156, %v1155
    %v1171 = vpack.c.bf16 %v1158, %v1157
    %v1172 = vpack.c.bf16 %v1160, %v1159
    %v1173 = vpack.c.bf16 %v1162, %v1161
    %v1174 = vpack.c.bf16 %v1164, %v1163
    %v1175 = vpack.c.bf16 %v1166, %v1165
    %v1176 = vpack.c.bf16 %v1168, %v1167
    %v1177 = vld [vmem:[%s11] sm:$0x1]
    %1178 = vmatprep.subr.bf16.mxu0 0
    %1179 = vmatpush1.bf16.msra.mxu0 %v1169
    %1180 = vmatprep.subr.bf16.mxu0 0
    %1181 = vmatpush1.bf16.msra.mxu0 %v1170
    %1182 = vmatprep.subr.bf16.mxu0 0
    %1183 = vmatpush1.bf16.msra.mxu0 %v1171
    %1184 = vmatprep.subr.bf16.mxu0 0
    %1185 = vmatpush1.bf16.msra.mxu0 %v1172
    %1186 = vmatprep.subr.bf16.mxu0 0
    %1187 = vmatpush1.bf16.msra.mxu0 %v1173
    %1188 = vmatprep.subr.bf16.mxu0 0
    %1189 = vmatpush1.bf16.msra.mxu0 %v1174
    %1190 = vmatprep.subr.bf16.mxu0 0
    %1191 = vmatpush1.bf16.msra.mxu0 %v1175
    %1192 = vmatprep.subr.bf16.mxu0 0
    %1193 = vmatpush1.bf16.msra.mxu0 %v1176
    %1194 = vmatprep.subr.bf16.mxu0 0
    %1195 = vmatpush1.bf16.msra.mxu0 0
    %1196 = vmatprep.subr.bf16.mxu0 0
    %1197 = vmatpush1.bf16.msra.mxu0 0
    %1198 = vmatprep.subr.bf16.mxu0 0
    %1199 = vmatpush1.bf16.msra.mxu0 0
    %1200 = vmatprep.subr.bf16.mxu0 0
    %1201 = vmatpush1.bf16.msra.mxu0 0
    %1202 = vmatprep.subr.bf16.mxu0 0
    %1203 = vmatpush1.bf16.msra.mxu0 0
    %1204 = vmatprep.subr.bf16.mxu0 0
    %1205 = vmatpush1.bf16.msra.mxu0 0
    %1206 = vmatprep.subr.bf16.mxu0 0
    %1207 = vmatpush1.bf16.msra.mxu0 0
    %1208 = vmatprep.subr.bf16.mxu0 0
    %1209 = vmatpush1.bf16.msra.mxu0 0
    %1210 = vmatprep.mubr.bf16.mxu0 0
    %1211 = vmatmul.mubr.bf16.gmra.mrb[0].mxu0 %v1177
    %v1212 = vpop.f32.mrb[0].mxu0
    %v1213 = vadd.f32 0.0, %v1212
    %v1214 = vpop.f32.mrb[0].mxu0
    %v1215 = vpop.f32.mrb[0].mxu0
    %v1216 = vpop.f32.mrb[0].mxu0
    %1217 = vdwg.mxu0
    %v1218 = vld [vmem:[%s12] sm:$0x1]
    %1219 = vmatprep.subr.bf16.mxu0 0
    %1220 = vmatpush1.bf16.msra.mxu0 %v1169
    %1221 = vmatprep.subr.bf16.mxu0 0
    %1222 = vmatpush1.bf16.msra.mxu0 %v1170
    %1223 = vmatprep.subr.bf16.mxu0 0
    %1224 = vmatpush1.bf16.msra.mxu0 %v1171
    %1225 = vmatprep.subr.bf16.mxu0 0
    %1226 = vmatpush1.bf16.msra.mxu0 %v1172
    %1227 = vmatprep.subr.bf16.mxu0 0
    %1228 = vmatpush1.bf16.msra.mxu0 %v1173
    %1229 = vmatprep.subr.bf16.mxu0 0
    %1230 = vmatpush1.bf16.msra.mxu0 %v1174
    %1231 = vmatprep.subr.bf16.mxu0 0
    %1232 = vmatpush1.bf16.msra.mxu0 %v1175
    %1233 = vmatprep.subr.bf16.mxu0 0
    %1234 = vmatpush1.bf16.msra.mxu0 %v1176
    %1235 = vmatprep.subr.bf16.mxu0 0
    %1236 = vmatpush1.bf16.msra.mxu0 0
    %1237 = vmatprep.subr.bf16.mxu0 0
    %1238 = vmatpush1.bf16.msra.mxu0 0
    %1239 = vmatprep.subr.bf16.mxu0 0
    %1240 = vmatpush1.bf16.msra.mxu0 0
    %1241 = vmatprep.subr.bf16.mxu0 0
    %1242 = vmatpush1.bf16.msra.mxu0 0
    %1243 = vmatprep.subr.bf16.mxu0 0
    %1244 = vmatpush1.bf16.msra.mxu0 0
    %1245 = vmatprep.subr.bf16.mxu0 0
    %1246 = vmatpush1.bf16.msra.mxu0 0
    %1247 = vmatprep.subr.bf16.mxu0 0
    %1248 = vmatpush1.bf16.msra.mxu0 0
    %1249 = vmatprep.subr.bf16.mxu0 0
    %1250 = vmatpush1.bf16.msra.mxu0 0
    %1251 = vmatprep.mubr.bf16.mxu0 0
    %1252 = vmatmul.mubr.bf16.gmra.mrb[0].mxu0 %v1218
    %v1253 = vpop.f32.mrb[0].mxu0
    %v1254 = vadd.f32 0.0, %v1253
    %v1255 = vpop.f32.mrb[0].mxu0
    %v1256 = vpop.f32.mrb[0].mxu0
    %v1257 = vpop.f32.mrb[0].mxu0
    %1258 = vdwg.mxu0
    %v1259 = vpack.c.bf16 %v1213, %v1213
    %v1260 = vld [vmem:[%s8] sm:$0xf]
    %v1261 = vld [vmem:[%s8 + $0x4] sm:$0xf]
    %v1262 = vld [vmem:[%s8 + $0x8] sm:$0xf]
    %v1263 = vld [vmem:[%s8 + $0xc] sm:$0xf]
    %v1264 = vld [vmem:[%s8 + $0x10] sm:$0xf]
    %v1265 = vld [vmem:[%s8 + $0x14] sm:$0xf]
    %v1266 = vld [vmem:[%s8 + $0x18] sm:$0xf]
    %v1267 = vld [vmem:[%s8 + $0x1c] sm:$0xf]
    %v1268 = vld [vmem:[%s8 + $0x20] sm:$0xf]
    %v1269 = vld [vmem:[%s8 + $0x24] sm:$0xf]
    %v1270 = vld [vmem:[%s8 + $0x28] sm:$0xf]
    %v1271 = vld [vmem:[%s8 + $0x2c] sm:$0xf]
    %v1272 = vld [vmem:[%s8 + $0x30] sm:$0xf]
    %v1273 = vld [vmem:[%s8 + $0x34] sm:$0xf]
    %v1274 = vld [vmem:[%s8 + $0x38] sm:$0xf]
    %v1275 = vld [vmem:[%s8 + $0x3c] sm:$0xf]
    %v1276 = vpack.c.bf16 %v1254, %v1254
    %v1277 = vld [vmem:[%s9] sm:$0xf]
    %v1278 = vld [vmem:[%s9 + $0x4] sm:$0xf]
    %v1279 = vld [vmem:[%s9 + $0x8] sm:$0xf]
    %v1280 = vld [vmem:[%s9 + $0xc] sm:$0xf]
    %v1281 = vld [vmem:[%s9 + $0x10] sm:$0xf]
    %v1282 = vld [vmem:[%s9 + $0x14] sm:$0xf]
    %v1283 = vld [vmem:[%s9 + $0x18] sm:$0xf]
    %v1284 = vld [vmem:[%s9 + $0x1c] sm:$0xf]
    %v1285 = vld [vmem:[%s9 + $0x20] sm:$0xf]
    %v1286 = vld [vmem:[%s9 + $0x24] sm:$0xf]
    %v1287 = vld [vmem:[%s9 + $0x28] sm:$0xf]
    %v1288 = vld [vmem:[%s9 + $0x2c] sm:$0xf]
    %v1289 = vld [vmem:[%s9 + $0x30] sm:$0xf]
    %v1290 = vld [vmem:[%s9 + $0x34] sm:$0xf]
    %v1291 = vld [vmem:[%s9 + $0x38] sm:$0xf]
    %v1292 = vld [vmem:[%s9 + $0x3c] sm:$0xf]
    %v1309 = vunpack.c.l.b16 %v1277
    %v1310 = vunpack.c.l.b16 %v1278
    %v1311 = vunpack.c.l.b16 %v1279
    %v1312 = vunpack.c.l.b16 %v1280
    %v1313 = vunpack.c.l.b16 %v1281
    %v1314 = vunpack.c.l.b16 %v1282
    %v1315 = vunpack.c.l.b16 %v1283
    %v1316 = vunpack.c.l.b16 %v1284
    %v1317 = vunpack.c.l.b16 %v1285
    %v1318 = vunpack.c.l.b16 %v1286
    %v1319 = vunpack.c.l.b16 %v1287
    %v1320 = vunpack.c.l.b16 %v1288
    %v1321 = vunpack.c.l.b16 %v1289
    %v1322 = vunpack.c.l.b16 %v1290
    %v1323 = vunpack.c.l.b16 %v1291
    %v1324 = vunpack.c.l.b16 %v1292
    %v1325 = vpack.c.b16 %v1310, %v1309
    %v1326 = vpack.c.b16 %v1312, %v1311
    %v1327 = vpack.c.b16 %v1314, %v1313
    %v1328 = vpack.c.b16 %v1316, %v1315
    %v1329 = vpack.c.b16 %v1318, %v1317
    %v1330 = vpack.c.b16 %v1320, %v1319
    %v1331 = vpack.c.b16 %v1322, %v1321
    %v1332 = vpack.c.b16 %v1324, %v1323
    %1341 = vmatprep.subr.bf16.mxu0 0
    %1342 = vmatpush1.bf16.msra.mxu0 %v1325
    %1343 = vmatprep.subr.bf16.mxu0 0
    %1344 = vmatpush1.bf16.msra.mxu0 %v1326
    %1345 = vmatprep.subr.bf16.mxu0 0
    %1346 = vmatpush1.bf16.msra.mxu0 %v1327
    %1347 = vmatprep.subr.bf16.mxu0 0
    %1348 = vmatpush1.bf16.msra.mxu0 %v1328
    %1349 = vmatprep.subr.bf16.mxu0 0
    %1350 = vmatpush1.bf16.msra.mxu0 %v1329
    %1351 = vmatprep.subr.bf16.mxu0 0
    %1352 = vmatpush1.bf16.msra.mxu0 %v1330
    %1353 = vmatprep.subr.bf16.mxu0 0
    %1354 = vmatpush1.bf16.msra.mxu0 %v1331
    %1355 = vmatprep.subr.bf16.mxu0 0
    %1356 = vmatpush1.bf16.msra.mxu0 %v1332
    %1357 = vmatprep.subr.bf16.mxu0 0
    %1358 = vmatpush1.bf16.msra.mxu0 0
    %1359 = vmatprep.subr.bf16.mxu0 0
    %1360 = vmatpush1.bf16.msra.mxu0 0
    %1361 = vmatprep.subr.bf16.mxu0 0
    %1362 = vmatpush1.bf16.msra.mxu0 0
    %1363 = vmatprep.subr.bf16.mxu0 0
    %1364 = vmatpush1.bf16.msra.mxu0 0
    %1365 = vmatprep.subr.bf16.mxu0 0
    %1366 = vmatpush1.bf16.msra.mxu0 0
    %1367 = vmatprep.subr.bf16.mxu0 0
    %1368 = vmatpush1.bf16.msra.mxu0 0
    %1369 = vmatprep.subr.bf16.mxu0 0
    %1370 = vmatpush1.bf16.msra.mxu0 0
    %1371 = vmatprep.subr.bf16.mxu0 0
    %1372 = vmatpush1.bf16.msra.mxu0 0
    %1373 = vmatprep.mubr.bf16.mxu0 0
    %1374 = vmatmul.mubr.bf16.gmra.mrb[0].mxu0 %v1276
    %v1375 = vpop.f32.mrb[0].mxu0
    %v1376 = vadd.f32 0.0, %v1375
    %v1377 = vpop.f32.mrb[0].mxu0
    %v1378 = vpop.f32.mrb[0].mxu0
    %v1379 = vpop.f32.mrb[0].mxu0
    %1380 = vdwg.mxu0
    %v1397 = vunpack.c.l.b16 %v1260
    %v1398 = vunpack.c.l.b16 %v1261
    %v1399 = vunpack.c.l.b16 %v1262
    %v1400 = vunpack.c.l.b16 %v1263
    %v1401 = vunpack.c.l.b16 %v1264
    %v1402 = vunpack.c.l.b16 %v1265
    %v1403 = vunpack.c.l.b16 %v1266
    %v1404 = vunpack.c.l.b16 %v1267
    %v1405 = vunpack.c.l.b16 %v1268
    %v1406 = vunpack.c.l.b16 %v1269
    %v1407 = vunpack.c.l.b16 %v1270
    %v1408 = vunpack.c.l.b16 %v1271
    %v1409 = vunpack.c.l.b16 %v1272
    %v1410 = vunpack.c.l.b16 %v1273
    %v1411 = vunpack.c.l.b16 %v1274
    %v1412 = vunpack.c.l.b16 %v1275
    %v1413 = vpack.c.b16 %v1398, %v1397
    %v1414 = vpack.c.b16 %v1400, %v1399
    %v1415 = vpack.c.b16 %v1402, %v1401
    %v1416 = vpack.c.b16 %v1404, %v1403
    %v1417 = vpack.c.b16 %v1406, %v1405
    %v1418 = vpack.c.b16 %v1408, %v1407
    %v1419 = vpack.c.b16 %v1410, %v1409
    %v1420 = vpack.c.b16 %v1412, %v1411
    %1429 = vmatprep.subr.bf16.mxu0 0
    %1430 = vmatpush1.bf16.msra.mxu0 %v1413
    %1431 = vmatprep.subr.bf16.mxu0 0
    %1432 = vmatpush1.bf16.msra.mxu0 %v1414
    %1433 = vmatprep.subr.bf16.mxu0 0
    %1434 = vmatpush1.bf16.msra.mxu0 %v1415
    %1435 = vmatprep.subr.bf16.mxu0 0
    %1436 = vmatpush1.bf16.msra.mxu0 %v1416
    %1437 = vmatprep.subr.bf16.mxu0 0
    %1438 = vmatpush1.bf16.msra.mxu0 %v1417
    %1439 = vmatprep.subr.bf16.mxu0 0
    %1440 = vmatpush1.bf16.msra.mxu0 %v1418
    %1441 = vmatprep.subr.bf16.mxu0 0
    %1442 = vmatpush1.bf16.msra.mxu0 %v1419
    %1443 = vmatprep.subr.bf16.mxu0 0
    %1444 = vmatpush1.bf16.msra.mxu0 %v1420
    %1445 = vmatprep.subr.bf16.mxu0 0
    %1446 = vmatpush1.bf16.msra.mxu0 0
    %1447 = vmatprep.subr.bf16.mxu0 0
    %1448 = vmatpush1.bf16.msra.mxu0 0
    %1449 = vmatprep.subr.bf16.mxu0 0
    %1450 = vmatpush1.bf16.msra.mxu0 0
    %1451 = vmatprep.subr.bf16.mxu0 0
    %1452 = vmatpush1.bf16.msra.mxu0 0
    %1453 = vmatprep.subr.bf16.mxu0 0
    %1454 = vmatpush1.bf16.msra.mxu0 0
    %1455 = vmatprep.subr.bf16.mxu0 0
    %1456 = vmatpush1.bf16.msra.mxu0 0
    %1457 = vmatprep.subr.bf16.mxu0 0
    %1458 = vmatpush1.bf16.msra.mxu0 0
    %1459 = vmatprep.subr.bf16.mxu0 0
    %1460 = vmatpush1.bf16.msra.mxu0 0
    %1461 = vmatprep.mubr.bf16.mxu0 0
    %1462 = vmatmul.mubr.bf16.gmra.mrb[0].mxu0 %v1259
    %v1463 = vpop.f32.mrb[0].mxu0
    %v1464 = vadd.f32 %v1376, %v1463
    %v1465 = vpop.f32.mrb[0].mxu0
    %v1466 = vpop.f32.mrb[0].mxu0
    %v1467 = vpop.f32.mrb[0].mxu0
    %1468 = vdwg.mxu0
    %v1469 = vld [vmem:[%s10] sm:$0x1]
    %v1471 = vlaneseq
    %v1472 = vshrl.u32 %v1471, 7
    %v1473 = vsub.s32 0, %v1472
    %v1474 = vrot.slane %v1469, %v1473
    %v1476 = vadd.f32 %v1464, %v1474
    %vm1477 = vcmask 58368
    %1478 = vst.msk [vmem:[#allocation10] sm:$0x3] %vm1477, %v1476
    // Predicated region
    $region70: #{tpu_custom_call.1} parent=1 // pred_check
      _
    $region71: #{tpu_custom_call.1} parent=1 // pred_check_branch
      %1480 = sbr.rel (0) target = $region73
    $region72: #{tpu_custom_call.1} parent=1 // pred_region
      %s1482 = ssub.s32 32, 32
      %1483 = vsyncadd [#allocation4], %s1482
      %s1485 = sshll.u32 [#allocation10], 4
      %s1486 = int_to_ptr.vmem [resolvable:$true] %s1485
      %1488 = dma.vmem_to_hbm [thread:$0]  %s1486, 32, %s13, [#allocation4]
    $region73: #{tpu_custom_call.1} parent=1 // pred_fallthru
      _
    // Predicated region
    $region74: #{tpu_custom_call.1} parent=1 // pred_check
      _
    $region75: #{tpu_custom_call.1} parent=1 // pred_check_branch
      %1490 = sbr.rel (0) target = $region77
    $region76: #{tpu_custom_call.1} parent=1 // pred_region
      %1491 = dma.done [#allocation4], 32
    $region77: #{tpu_custom_call.1} parent=1 // pred_fallthru
      _
    %1492 = vsyncpa [#allocation3], 1
    %1493 = vsyncpa [#allocation6], 1
    %1494 = vsyncpa [#allocation9], 1
    %1495 = vsyncpa [#allocation4], 1

</llo_original>
